<compile_context>
chip_gen: v6e
topology: v6e:2x2x1
jax: 0.10.0
libtpu: 0.0.40
codegen_flags: <defaults>
</compile_context>

<pallas_src>
import functools

import jax
import jax.numpy as jnp
import numpy as np
from jax import lax
from jax.experimental import pallas as pl
from jax.experimental.pallas import tpu as pltpu

LAYERNORM_EPS = 1e-12
NSEM = 16          # in-flight word-row gather DMAs per buffer slot (2 slots -> 32 sems)
ISSUE_UNROLL = 8   # unroll factor for the DMA issue / wait loops


def bert_embeddings(input_ids, token_type_ids, position_ids,
                    word_table, tok_type_table, pos_table,
                    ln_gamma, ln_beta, *, block_tokens=256, num_chunks=2):
    """BertEmbeddings forward (eval mode).

    input_ids/token_type_ids/position_ids: (B, S) int32 (the latter two may be None).
    word_table: (V, H); tok_type_table: (T, H); pos_table: (P, H); ln_*: (H,).
    block_tokens: tokens per grid step (multiple of 8; use 256-512 for production).
    num_chunks: outer 'parallel' grid size (>=2 lets v7x's two TensorCores split work).
    """
    B, S = input_ids.shape
    V, H = word_table.shape
    n_tok = B * S

    if position_ids is None:
        position_ids = jnp.broadcast_to(
            jnp.arange(S, dtype=jnp.int32)[None, :], (B, S))
    if token_type_ids is None:
        token_type_ids = jnp.zeros((B, S), jnp.int32)

    tq = int(block_tokens)
    assert tq % 8 == 0, "block_tokens must be a multiple of 8"
    n_blk = -(-n_tok // tq)                      # token blocks needed
    nc = max(1, min(int(num_chunks), n_blk))     # outer parallel chunks
    m_inner = -(-n_blk // nc)                    # blocks per chunk (sequential)
    n_blk_pad = nc * m_inner
    n_pad = n_blk_pad * tq

    def _flat_pad(a):
        a = a.reshape(n_tok).astype(jnp.int32)
        return jnp.pad(a, (0, n_pad - n_tok))    # pad with id 0 (always in range)

    ids_flat = _flat_pad(input_ids)                        # SMEM scalar prefetch
    pids_col = _flat_pad(position_ids).reshape(n_pad, 1)   # VMEM (TQ, 1) blocks
    tids_col = _flat_pad(token_type_ids).reshape(n_pad, 1)

    def _pad_rows(tbl, mult=8):
        r = tbl.shape[0]
        r_pad = -(-r // mult) * mult
        if r_pad != r:
            tbl = jnp.pad(tbl, ((0, r_pad - r), (0, 0)))
        return tbl

    pos_tbl = _pad_rows(pos_table)       # small -> pinned whole in VMEM
    tt_tbl = _pad_rows(tok_type_table)
    P = pos_tbl.shape[0]
    T = tt_tbl.shape[0]
    t_actual = tok_type_table.shape[0]
    out_dtype = word_table.dtype

    # LayerNorm params pre-cast once (no per-step casts inside the kernel).
    gamma2d = ln_gamma.reshape(1, H).astype(jnp.float32)
    beta2d = ln_beta.reshape(1, H).astype(jnp.float32)

    def _kernel(ids_smem,                     # scalar prefetch (SMEM), (n_pad,)
                pids_ref, tids_ref,           # (TQ, 1) int32
                pos_ref, tt_ref,              # pinned tables (P,H) / (T,H)
                g_ref, b_ref,                 # LayerNorm params (1, H) f32
                w_hbm,                        # word table, raw HBM ref
                o_ref,                        # output (TQ, H)
                wbuf, sem):                   # scratch: (2,TQ,H) VMEM + (2,NSEM) sems
        c = pl.program_id(0)                  # outer (parallel) chunk
        j = pl.program_id(1)                  # inner (sequential) block within chunk
        blk = c * m_inner + j                 # global token-block index
        slot = j & 1                          # double-buffer slot for this block

        def _issue_block(block_idx, buf_slot):
            """Start the TQ word-row gather DMAs for block_idx into wbuf[buf_slot]."""
            base = block_idx * tq

            def body(r, carry):
                row = ids_smem[base + r]
                pltpu.make_async_copy(
                    w_hbm.at[pl.ds(row, 1), :],
                    wbuf.at[buf_slot, pl.ds(r, 1), :],
                    sem.at[buf_slot, r % NSEM]).start()
                return carry

            lax.fori_loop(0, tq, body, 0, unroll=min(ISSUE_UNROLL, tq))

        # Prologue: first block of this chunk has not been prefetched by a prior step.
        @pl.when(j == 0)
        def _():
            _issue_block(blk, slot)

        # Prefetch next block's rows into the other slot; these DMAs stay in flight
        # across the grid-step boundary and land during this step's compute.
        @pl.when(j + 1 < m_inner)
        def _():
            _issue_block(blk + 1, 1 - slot)

        # Wait for *this* block's row gathers (issued at the previous step, or just
        # above when j == 0).  Descriptors are rebuilt with the real source rows.
        base_i = blk * tq

        def wait_body(r, carry):
            row = ids_smem[base_i + r]
            pltpu.make_async_copy(
                w_hbm.at[pl.ds(row, 1), :],
                wbuf.at[slot, pl.ds(r, 1), :],
                sem.at[slot, r % NSEM]).wait()
            return carry

        lax.fori_loop(0, tq, wait_body, 0, unroll=min(ISSUE_UNROLL, tq))

        # ---- position lookup: one-hot (table dtype) x pinned table on the MXU ----
        pos_oh = (lax.broadcasted_iota(jnp.int32, (tq, P), 1)
                  == pids_ref[...]).astype(pos_ref.dtype)
        pos_e = jnp.dot(pos_oh, pos_ref[...], preferred_element_type=jnp.float32)

        # ---- token-type lookup: tiny T -> VPU select over table rows ----
        # (out-of-range token_type_ids fall back to row 0 rather than erroring)
        tids = tids_ref[...]                                       # (TQ, 1)
        tt_e = jnp.broadcast_to(
            tt_ref[pl.ds(0, 1), :].astype(jnp.float32), (tq, H))
        for t in range(1, t_actual):
            row = tt_ref[pl.ds(t, 1), :].astype(jnp.float32)       # (1, H)
            tt_e = jnp.where(tids == t, row, tt_e)

        x = wbuf[slot].astype(jnp.float32) + pos_e + tt_e          # (TQ, H)

        # ---- BertLayerNorm (mean/var over hidden, eps inside the sqrt) ----
        u = jnp.mean(x, axis=-1, keepdims=True)
        d = x - u
        var = jnp.mean(d * d, axis=-1, keepdims=True)
        xn = d * lax.rsqrt(var + LAYERNORM_EPS)
        y = g_ref[...] * xn + b_ref[...]

        # eval-mode dropout == identity
        o_ref[...] = y.astype(o_ref.dtype)

    # Token-indexed arrays are addressed by the global block index c*m_inner + j.
    def _tok_map(c, j, ids):
        return (c * m_inner + j, 0)

    grid_spec = pltpu.PrefetchScalarGridSpec(
        num_scalar_prefetch=1,
        grid=(nc, m_inner),
        in_specs=[
            pl.BlockSpec((tq, 1), _tok_map),                 # position ids column
            pl.BlockSpec((tq, 1), _tok_map),                 # token-type ids column
            pl.BlockSpec((P, H), lambda c, j, ids: (0, 0)),  # position table (VMEM)
            pl.BlockSpec((T, H), lambda c, j, ids: (0, 0)),  # token-type table (VMEM)
            pl.BlockSpec((1, H), lambda c, j, ids: (0, 0)),  # gamma
            pl.BlockSpec((1, H), lambda c, j, ids: (0, 0)),  # beta
            pl.BlockSpec(memory_space=pl.ANY),               # word table stays in HBM
        ],
        out_specs=pl.BlockSpec((tq, H), _tok_map),
        scratch_shapes=[
            pltpu.VMEM((2, tq, H), word_table.dtype),        # double-buffered word rows
            pltpu.SemaphoreType.DMA((2, NSEM)),
        ],
    )

    # Explicit VMEM budget so large production tilings (big tq / H / P) keep the
    # intended blocking instead of silently hitting the default scoped limit.
    itm = jnp.dtype(word_table.dtype).itemsize
    est = (2 * tq * H * jnp.dtype(out_dtype).itemsize   # double-buffered output blocks
           + 2 * tq * H * itm                           # wbuf (2, TQ, H)
           + 2 * (P + T + 2) * H * itm                  # pinned tables + gamma/beta (x2)
           + 2 * 2 * tq * 4                             # id columns
           + tq * P * itm                               # position one-hot
           + 8 * tq * H * 4                             # f32 temporaries
           + (2 << 20))                                 # slack
    vmem_limit = int(min(max(est, 32 << 20), 64 << 20))

    out = pl.pallas_call(
        _kernel,
        out_shape=jax.ShapeDtypeStruct((n_pad, H), out_dtype),
        grid_spec=grid_spec,
        compiler_params=pltpu.CompilerParams(
            dimension_semantics=("parallel", "arbitrary"),
            vmem_limit_bytes=vmem_limit),
    )(ids_flat, pids_col, tids_col, pos_tbl, tt_tbl, gamma2d, beta2d, word_table)

    return out[:n_tok].reshape(B, S, H)


def _reference(input_ids, token_type_ids, position_ids,
               word_table, tok_type_table, pos_table, gamma, beta):
    x = (word_table[input_ids]
         + pos_table[position_ids]
         + tok_type_table[token_type_ids])
    u = x.mean(-1, keepdims=True)
    s = ((x - u) ** 2).mean(-1, keepdims=True)
    xn = (x - u) / jnp.sqrt(s + LAYERNORM_EPS)
    return gamma * xn + beta


if __name__ == "__main__":
    # Small BERT-style config; H=128 keeps the output tiles lane-dense, and the
    # token count (32) with block_tokens=8, num_chunks=2 exercises both the per-chunk
    # prologue and the cross-step prefetch path (2 chunks x 2 blocks each).
    vocab_size = 100
    type_vocab_size = 2
    max_position_embeddings = 32
    hidden_size = 128
    batch, seq = 2, 16

    key = jax.random.PRNGKey(0)
    k_w, k_t, k_p, k_ids, k_tids, k_g, k_b = jax.random.split(key, 7)

    word_table = jax.random.normal(k_w, (vocab_size, hidden_size), jnp.float32) * 0.02
    tok_type_table = jax.random.normal(k_t, (type_vocab_size, hidden_size), jnp.float32) * 0.02
    pos_table = jax.random.normal(k_p, (max_position_embeddings, hidden_size), jnp.float32) * 0.02
    ln_gamma = jnp.ones((hidden_size,), jnp.float32) \
        + 0.1 * jax.random.normal(k_g, (hidden_size,), jnp.float32)
    ln_beta = 0.1 * jax.random.normal(k_b, (hidden_size,), jnp.float32)

    input_ids = jax.random.randint(k_ids, (batch, seq), 0, vocab_size, jnp.int32)
    token_ids = jax.random.randint(k_tids, (batch, seq), 0, type_vocab_size, jnp.int32)
    position_ids = jnp.broadcast_to(
        jnp.arange(seq, dtype=jnp.int32)[None, :], (batch, seq))

    run = functools.partial(bert_embeddings, block_tokens=8, num_chunks=2)
    out = run(input_ids, token_ids, position_ids,
              word_table, tok_type_table, pos_table, ln_gamma, ln_beta)
    out = jax.block_until_ready(out)

    ref = _reference(input_ids, token_ids, position_ids,
                     word_table, tok_type_table, pos_table, ln_gamma, ln_beta)

    assert out.shape == (batch, seq, hidden_size)
    np.testing.assert_allclose(np.asarray(out), np.asarray(ref), rtol=1e-5, atol=1e-5)
    print("KERNEL_OK")
</pallas_src>

<mosaic_0001>
module attributes {stable_mosaic.version = 11 : i64} {
  func.func @_kernel(%arg0: i32, %arg1: i32, %arg2: memref<32xi32, #tpu.memory_space<smem>>, %arg3: memref<8x1xi32, #tpu.memory_space<vmem>>, %arg4: memref<8x1xi32, #tpu.memory_space<vmem>>, %arg5: memref<32x128xf32, #tpu.memory_space<vmem>>, %arg6: memref<8x128xf32, #tpu.memory_space<vmem>>, %arg7: memref<1x128xf32, #tpu.memory_space<vmem>>, %arg8: memref<1x128xf32, #tpu.memory_space<vmem>>, %arg9: memref<100x128xf32, #tpu.memory_space<any>>, %arg10: memref<8x128xf32, #tpu.memory_space<vmem>>, %arg11: memref<2x8x128xf32, #tpu.memory_space<vmem>>, %arg12: memref<2x16x!tpu.dma_semaphore, #tpu.memory_space<semaphore_mem>>) attributes {dimension_semantics = [#tpu.dimension_semantics<parallel>, #tpu.dimension_semantics<arbitrary>], iteration_bounds = array<i64: 2, 2>, scalar_prefetch = 1 : i64, scratch_operands = 2 : i64, tpu.core_type = #tpu.core_type<tc>, window_params = [{transform_indices = @transform_0, window_bounds = array<i64: 8, 1>}, {transform_indices = @transform_1, window_bounds = array<i64: 8, 1>}, {pipeline_mode = #tpu.pipeline_mode<synchronous>, transform_indices = @transform_2, window_bounds = array<i64: 32, 128>}, {pipeline_mode = #tpu.pipeline_mode<synchronous>, transform_indices = @transform_3, window_bounds = array<i64: 8, 128>}, {pipeline_mode = #tpu.pipeline_mode<synchronous>, transform_indices = @transform_4, window_bounds = array<i64: 1, 128>}, {pipeline_mode = #tpu.pipeline_mode<synchronous>, transform_indices = @transform_5, window_bounds = array<i64: 1, 128>}, {}, {transform_indices = @transform_7, window_bounds = array<i64: 8, 128>}]} {
    %c2_i32 = arith.constant 2 : i32
    %0 = arith.muli %arg0, %c2_i32 : i32
    %1 = arith.addi %0, %arg1 : i32
    %c1_i32 = arith.constant 1 : i32
    %2 = arith.andi %arg1, %c1_i32 : i32
    %c0_i32 = arith.constant 0 : i32
    %3 = arith.cmpi eq, %arg1, %c0_i32 : i32
    %4 = arith.extui %3 : i1 to i32
    %c0_i32_0 = arith.constant 0 : i32
    %5 = arith.cmpi ne, %4, %c0_i32_0 : i32
    scf.if %5 {
      %c8_i32_93 = arith.constant 8 : i32
      %203 = arith.muli %1, %c8_i32_93 : i32
      %c0_i32_94 = arith.constant 0 : i32
      %204 = arith.addi %203, %c0_i32_94 : i32
      %205 = arith.index_cast %204 : i32 to index
      %206 = memref.load %arg2[%205] : memref<32xi32, #tpu.memory_space<smem>>
      %c16_i32_95 = arith.constant 16 : i32
      %c0_i32_96 = arith.constant 0 : i32
      %207 = arith.cmpi eq, %c16_i32_95, %c0_i32_96 : i32
      %c1_i32_97 = arith.constant 1 : i32
      %208 = arith.select %207, %c1_i32_97, %c16_i32_95 : i32
      %209 = arith.remsi %c0_i32_94, %208 : i32
      %c0_i32_98 = arith.constant 0 : i32
      %210 = arith.cmpi ne, %209, %c0_i32_98 : i32
      %c0_i32_99 = arith.constant 0 : i32
      %211 = arith.cmpi slt, %209, %c0_i32_99 : i32
      %c0_i32_100 = arith.constant 0 : i32
      %212 = arith.cmpi slt, %208, %c0_i32_100 : i32
      %213 = arith.xori %211, %212 : i1
      %214 = arith.andi %213, %210 : i1
      %215 = arith.addi %209, %208 : i32
      %216 = arith.select %214, %215, %209 : i32
      %c0_i32_101 = arith.constant 0 : i32
      %217 = tpu.memref_slice %arg9[%206, %c0_i32_101] : memref<100x128xf32, #tpu.memory_space<any>> -> memref<1x128xf32, #tpu.memory_space<any>>
      %c0_i32_102 = arith.constant 0 : i32
      %218 = tpu.memref_slice %arg11[%2, %c0_i32_94, %c0_i32_102] : memref<2x8x128xf32, #tpu.memory_space<vmem>> -> memref<1x1x128xf32, #tpu.memory_space<vmem>>
      %219 = tpu.memref_squeeze %218 : memref<1x1x128xf32, #tpu.memory_space<vmem>> -> memref<1x128xf32, #tpu.memory_space<vmem>>
      %220 = tpu.memref_slice %arg12[%2, %216] : memref<2x16x!tpu.dma_semaphore, #tpu.memory_space<semaphore_mem>> -> memref<1x1x!tpu.dma_semaphore, #tpu.memory_space<semaphore_mem>>
      %221 = tpu.memref_squeeze %220 : memref<1x1x!tpu.dma_semaphore, #tpu.memory_space<semaphore_mem>> -> memref<!tpu.dma_semaphore, #tpu.memory_space<semaphore_mem>>
      tpu.enqueue_dma source(%217 : memref<1x128xf32, #tpu.memory_space<any>>) target(%219 : memref<1x128xf32, #tpu.memory_space<vmem>>) target_semaphore(%221 : memref<!tpu.dma_semaphore, #tpu.memory_space<semaphore_mem>>)
      %c1_i32_103 = arith.constant 1 : i32
      %222 = arith.addi %203, %c1_i32_103 : i32
      %223 = arith.index_cast %222 : i32 to index
      %224 = memref.load %arg2[%223] : memref<32xi32, #tpu.memory_space<smem>>
      %c16_i32_104 = arith.constant 16 : i32
      %c0_i32_105 = arith.constant 0 : i32
      %225 = arith.cmpi eq, %c16_i32_104, %c0_i32_105 : i32
      %c1_i32_106 = arith.constant 1 : i32
      %226 = arith.select %225, %c1_i32_106, %c16_i32_104 : i32
      %227 = arith.remsi %c1_i32_103, %226 : i32
      %c0_i32_107 = arith.constant 0 : i32
      %228 = arith.cmpi ne, %227, %c0_i32_107 : i32
      %c0_i32_108 = arith.constant 0 : i32
      %229 = arith.cmpi slt, %227, %c0_i32_108 : i32
      %c0_i32_109 = arith.constant 0 : i32
      %230 = arith.cmpi slt, %226, %c0_i32_109 : i32
      %231 = arith.xori %229, %230 : i1
      %232 = arith.andi %231, %228 : i1
      %233 = arith.addi %227, %226 : i32
      %234 = arith.select %232, %233, %227 : i32
      %c0_i32_110 = arith.constant 0 : i32
      %235 = tpu.memref_slice %arg9[%224, %c0_i32_110] : memref<100x128xf32, #tpu.memory_space<any>> -> memref<1x128xf32, #tpu.memory_space<any>>
      %c0_i32_111 = arith.constant 0 : i32
      %236 = tpu.memref_slice %arg11[%2, %c1_i32_103, %c0_i32_111] : memref<2x8x128xf32, #tpu.memory_space<vmem>> -> memref<1x1x128xf32, #tpu.memory_space<vmem>>
      %237 = tpu.memref_squeeze %236 : memref<1x1x128xf32, #tpu.memory_space<vmem>> -> memref<1x128xf32, #tpu.memory_space<vmem>>
      %238 = tpu.memref_slice %arg12[%2, %234] : memref<2x16x!tpu.dma_semaphore, #tpu.memory_space<semaphore_mem>> -> memref<1x1x!tpu.dma_semaphore, #tpu.memory_space<semaphore_mem>>
      %239 = tpu.memref_squeeze %238 : memref<1x1x!tpu.dma_semaphore, #tpu.memory_space<semaphore_mem>> -> memref<!tpu.dma_semaphore, #tpu.memory_space<semaphore_mem>>
      tpu.enqueue_dma source(%235 : memref<1x128xf32, #tpu.memory_space<any>>) target(%237 : memref<1x128xf32, #tpu.memory_space<vmem>>) target_semaphore(%239 : memref<!tpu.dma_semaphore, #tpu.memory_space<semaphore_mem>>)
      %c2_i32_112 = arith.constant 2 : i32
      %240 = arith.addi %203, %c2_i32_112 : i32
      %241 = arith.index_cast %240 : i32 to index
      %242 = memref.load %arg2[%241] : memref<32xi32, #tpu.memory_space<smem>>
      %c16_i32_113 = arith.constant 16 : i32
      %c0_i32_114 = arith.constant 0 : i32
      %243 = arith.cmpi eq, %c16_i32_113, %c0_i32_114 : i32
      %c1_i32_115 = arith.constant 1 : i32
      %244 = arith.select %243, %c1_i32_115, %c16_i32_113 : i32
      %245 = arith.remsi %c2_i32_112, %244 : i32
      %c0_i32_116 = arith.constant 0 : i32
      %246 = arith.cmpi ne, %245, %c0_i32_116 : i32
      %c0_i32_117 = arith.constant 0 : i32
      %247 = arith.cmpi slt, %245, %c0_i32_117 : i32
      %c0_i32_118 = arith.constant 0 : i32
      %248 = arith.cmpi slt, %244, %c0_i32_118 : i32
      %249 = arith.xori %247, %248 : i1
      %250 = arith.andi %249, %246 : i1
      %251 = arith.addi %245, %244 : i32
      %252 = arith.select %250, %251, %245 : i32
      %c0_i32_119 = arith.constant 0 : i32
      %253 = tpu.memref_slice %arg9[%242, %c0_i32_119] : memref<100x128xf32, #tpu.memory_space<any>> -> memref<1x128xf32, #tpu.memory_space<any>>
      %c0_i32_120 = arith.constant 0 : i32
      %254 = tpu.memref_slice %arg11[%2, %c2_i32_112, %c0_i32_120] : memref<2x8x128xf32, #tpu.memory_space<vmem>> -> memref<1x1x128xf32, #tpu.memory_space<vmem>>
      %255 = tpu.memref_squeeze %254 : memref<1x1x128xf32, #tpu.memory_space<vmem>> -> memref<1x128xf32, #tpu.memory_space<vmem>>
      %256 = tpu.memref_slice %arg12[%2, %252] : memref<2x16x!tpu.dma_semaphore, #tpu.memory_space<semaphore_mem>> -> memref<1x1x!tpu.dma_semaphore, #tpu.memory_space<semaphore_mem>>
      %257 = tpu.memref_squeeze %256 : memref<1x1x!tpu.dma_semaphore, #tpu.memory_space<semaphore_mem>> -> memref<!tpu.dma_semaphore, #tpu.memory_space<semaphore_mem>>
      tpu.enqueue_dma source(%253 : memref<1x128xf32, #tpu.memory_space<any>>) target(%255 : memref<1x128xf32, #tpu.memory_space<vmem>>) target_semaphore(%257 : memref<!tpu.dma_semaphore, #tpu.memory_space<semaphore_mem>>)
      %c3_i32_121 = arith.constant 3 : i32
      %258 = arith.addi %203, %c3_i32_121 : i32
      %259 = arith.index_cast %258 : i32 to index
      %260 = memref.load %arg2[%259] : memref<32xi32, #tpu.memory_space<smem>>
      %c16_i32_122 = arith.constant 16 : i32
      %c0_i32_123 = arith.constant 0 : i32
      %261 = arith.cmpi eq, %c16_i32_122, %c0_i32_123 : i32
      %c1_i32_124 = arith.constant 1 : i32
      %262 = arith.select %261, %c1_i32_124, %c16_i32_122 : i32
      %263 = arith.remsi %c3_i32_121, %262 : i32
      %c0_i32_125 = arith.constant 0 : i32
      %264 = arith.cmpi ne, %263, %c0_i32_125 : i32
      %c0_i32_126 = arith.constant 0 : i32
      %265 = arith.cmpi slt, %263, %c0_i32_126 : i32
      %c0_i32_127 = arith.constant 0 : i32
      %266 = arith.cmpi slt, %262, %c0_i32_127 : i32
      %267 = arith.xori %265, %266 : i1
      %268 = arith.andi %267, %264 : i1
      %269 = arith.addi %263, %262 : i32
      %270 = arith.select %268, %269, %263 : i32
      %c0_i32_128 = arith.constant 0 : i32
      %271 = tpu.memref_slice %arg9[%260, %c0_i32_128] : memref<100x128xf32, #tpu.memory_space<any>> -> memref<1x128xf32, #tpu.memory_space<any>>
      %c0_i32_129 = arith.constant 0 : i32
      %272 = tpu.memref_slice %arg11[%2, %c3_i32_121, %c0_i32_129] : memref<2x8x128xf32, #tpu.memory_space<vmem>> -> memref<1x1x128xf32, #tpu.memory_space<vmem>>
      %273 = tpu.memref_squeeze %272 : memref<1x1x128xf32, #tpu.memory_space<vmem>> -> memref<1x128xf32, #tpu.memory_space<vmem>>
      %274 = tpu.memref_slice %arg12[%2, %270] : memref<2x16x!tpu.dma_semaphore, #tpu.memory_space<semaphore_mem>> -> memref<1x1x!tpu.dma_semaphore, #tpu.memory_space<semaphore_mem>>
      %275 = tpu.memref_squeeze %274 : memref<1x1x!tpu.dma_semaphore, #tpu.memory_space<semaphore_mem>> -> memref<!tpu.dma_semaphore, #tpu.memory_space<semaphore_mem>>
      tpu.enqueue_dma source(%271 : memref<1x128xf32, #tpu.memory_space<any>>) target(%273 : memref<1x128xf32, #tpu.memory_space<vmem>>) target_semaphore(%275 : memref<!tpu.dma_semaphore, #tpu.memory_space<semaphore_mem>>)
      %c4_i32_130 = arith.constant 4 : i32
      %276 = arith.addi %203, %c4_i32_130 : i32
      %277 = arith.index_cast %276 : i32 to index
      %278 = memref.load %arg2[%277] : memref<32xi32, #tpu.memory_space<smem>>
      %c16_i32_131 = arith.constant 16 : i32
      %c0_i32_132 = arith.constant 0 : i32
      %279 = arith.cmpi eq, %c16_i32_131, %c0_i32_132 : i32
      %c1_i32_133 = arith.constant 1 : i32
      %280 = arith.select %279, %c1_i32_133, %c16_i32_131 : i32
      %281 = arith.remsi %c4_i32_130, %280 : i32
      %c0_i32_134 = arith.constant 0 : i32
      %282 = arith.cmpi ne, %281, %c0_i32_134 : i32
      %c0_i32_135 = arith.constant 0 : i32
      %283 = arith.cmpi slt, %281, %c0_i32_135 : i32
      %c0_i32_136 = arith.constant 0 : i32
      %284 = arith.cmpi slt, %280, %c0_i32_136 : i32
      %285 = arith.xori %283, %284 : i1
      %286 = arith.andi %285, %282 : i1
      %287 = arith.addi %281, %280 : i32
      %288 = arith.select %286, %287, %281 : i32
      %c0_i32_137 = arith.constant 0 : i32
      %289 = tpu.memref_slice %arg9[%278, %c0_i32_137] : memref<100x128xf32, #tpu.memory_space<any>> -> memref<1x128xf32, #tpu.memory_space<any>>
      %c0_i32_138 = arith.constant 0 : i32
      %290 = tpu.memref_slice %arg11[%2, %c4_i32_130, %c0_i32_138] : memref<2x8x128xf32, #tpu.memory_space<vmem>> -> memref<1x1x128xf32, #tpu.memory_space<vmem>>
      %291 = tpu.memref_squeeze %290 : memref<1x1x128xf32, #tpu.memory_space<vmem>> -> memref<1x128xf32, #tpu.memory_space<vmem>>
      %292 = tpu.memref_slice %arg12[%2, %288] : memref<2x16x!tpu.dma_semaphore, #tpu.memory_space<semaphore_mem>> -> memref<1x1x!tpu.dma_semaphore, #tpu.memory_space<semaphore_mem>>
      %293 = tpu.memref_squeeze %292 : memref<1x1x!tpu.dma_semaphore, #tpu.memory_space<semaphore_mem>> -> memref<!tpu.dma_semaphore, #tpu.memory_space<semaphore_mem>>
      tpu.enqueue_dma source(%289 : memref<1x128xf32, #tpu.memory_space<any>>) target(%291 : memref<1x128xf32, #tpu.memory_space<vmem>>) target_semaphore(%293 : memref<!tpu.dma_semaphore, #tpu.memory_space<semaphore_mem>>)
      %c5_i32_139 = arith.constant 5 : i32
      %294 = arith.addi %203, %c5_i32_139 : i32
      %295 = arith.index_cast %294 : i32 to index
      %296 = memref.load %arg2[%295] : memref<32xi32, #tpu.memory_space<smem>>
      %c16_i32_140 = arith.constant 16 : i32
      %c0_i32_141 = arith.constant 0 : i32
      %297 = arith.cmpi eq, %c16_i32_140, %c0_i32_141 : i32
      %c1_i32_142 = arith.constant 1 : i32
      %298 = arith.select %297, %c1_i32_142, %c16_i32_140 : i32
      %299 = arith.remsi %c5_i32_139, %298 : i32
      %c0_i32_143 = arith.constant 0 : i32
      %300 = arith.cmpi ne, %299, %c0_i32_143 : i32
      %c0_i32_144 = arith.constant 0 : i32
      %301 = arith.cmpi slt, %299, %c0_i32_144 : i32
      %c0_i32_145 = arith.constant 0 : i32
      %302 = arith.cmpi slt, %298, %c0_i32_145 : i32
      %303 = arith.xori %301, %302 : i1
      %304 = arith.andi %303, %300 : i1
      %305 = arith.addi %299, %298 : i32
      %306 = arith.select %304, %305, %299 : i32
      %c0_i32_146 = arith.constant 0 : i32
      %307 = tpu.memref_slice %arg9[%296, %c0_i32_146] : memref<100x128xf32, #tpu.memory_space<any>> -> memref<1x128xf32, #tpu.memory_space<any>>
      %c0_i32_147 = arith.constant 0 : i32
      %308 = tpu.memref_slice %arg11[%2, %c5_i32_139, %c0_i32_147] : memref<2x8x128xf32, #tpu.memory_space<vmem>> -> memref<1x1x128xf32, #tpu.memory_space<vmem>>
      %309 = tpu.memref_squeeze %308 : memref<1x1x128xf32, #tpu.memory_space<vmem>> -> memref<1x128xf32, #tpu.memory_space<vmem>>
      %310 = tpu.memref_slice %arg12[%2, %306] : memref<2x16x!tpu.dma_semaphore, #tpu.memory_space<semaphore_mem>> -> memref<1x1x!tpu.dma_semaphore, #tpu.memory_space<semaphore_mem>>
      %311 = tpu.memref_squeeze %310 : memref<1x1x!tpu.dma_semaphore, #tpu.memory_space<semaphore_mem>> -> memref<!tpu.dma_semaphore, #tpu.memory_space<semaphore_mem>>
      tpu.enqueue_dma source(%307 : memref<1x128xf32, #tpu.memory_space<any>>) target(%309 : memref<1x128xf32, #tpu.memory_space<vmem>>) target_semaphore(%311 : memref<!tpu.dma_semaphore, #tpu.memory_space<semaphore_mem>>)
      %c6_i32_148 = arith.constant 6 : i32
      %312 = arith.addi %203, %c6_i32_148 : i32
      %313 = arith.index_cast %312 : i32 to index
      %314 = memref.load %arg2[%313] : memref<32xi32, #tpu.memory_space<smem>>
      %c16_i32_149 = arith.constant 16 : i32
      %c0_i32_150 = arith.constant 0 : i32
      %315 = arith.cmpi eq, %c16_i32_149, %c0_i32_150 : i32
      %c1_i32_151 = arith.constant 1 : i32
      %316 = arith.select %315, %c1_i32_151, %c16_i32_149 : i32
      %317 = arith.remsi %c6_i32_148, %316 : i32
      %c0_i32_152 = arith.constant 0 : i32
      %318 = arith.cmpi ne, %317, %c0_i32_152 : i32
      %c0_i32_153 = arith.constant 0 : i32
      %319 = arith.cmpi slt, %317, %c0_i32_153 : i32
      %c0_i32_154 = arith.constant 0 : i32
      %320 = arith.cmpi slt, %316, %c0_i32_154 : i32
      %321 = arith.xori %319, %320 : i1
      %322 = arith.andi %321, %318 : i1
      %323 = arith.addi %317, %316 : i32
      %324 = arith.select %322, %323, %317 : i32
      %c0_i32_155 = arith.constant 0 : i32
      %325 = tpu.memref_slice %arg9[%314, %c0_i32_155] : memref<100x128xf32, #tpu.memory_space<any>> -> memref<1x128xf32, #tpu.memory_space<any>>
      %c0_i32_156 = arith.constant 0 : i32
      %326 = tpu.memref_slice %arg11[%2, %c6_i32_148, %c0_i32_156] : memref<2x8x128xf32, #tpu.memory_space<vmem>> -> memref<1x1x128xf32, #tpu.memory_space<vmem>>
      %327 = tpu.memref_squeeze %326 : memref<1x1x128xf32, #tpu.memory_space<vmem>> -> memref<1x128xf32, #tpu.memory_space<vmem>>
      %328 = tpu.memref_slice %arg12[%2, %324] : memref<2x16x!tpu.dma_semaphore, #tpu.memory_space<semaphore_mem>> -> memref<1x1x!tpu.dma_semaphore, #tpu.memory_space<semaphore_mem>>
      %329 = tpu.memref_squeeze %328 : memref<1x1x!tpu.dma_semaphore, #tpu.memory_space<semaphore_mem>> -> memref<!tpu.dma_semaphore, #tpu.memory_space<semaphore_mem>>
      tpu.enqueue_dma source(%325 : memref<1x128xf32, #tpu.memory_space<any>>) target(%327 : memref<1x128xf32, #tpu.memory_space<vmem>>) target_semaphore(%329 : memref<!tpu.dma_semaphore, #tpu.memory_space<semaphore_mem>>)
      %c7_i32_157 = arith.constant 7 : i32
      %330 = arith.addi %203, %c7_i32_157 : i32
      %331 = arith.index_cast %330 : i32 to index
      %332 = memref.load %arg2[%331] : memref<32xi32, #tpu.memory_space<smem>>
      %c16_i32_158 = arith.constant 16 : i32
      %c0_i32_159 = arith.constant 0 : i32
      %333 = arith.cmpi eq, %c16_i32_158, %c0_i32_159 : i32
      %c1_i32_160 = arith.constant 1 : i32
      %334 = arith.select %333, %c1_i32_160, %c16_i32_158 : i32
      %335 = arith.remsi %c7_i32_157, %334 : i32
      %c0_i32_161 = arith.constant 0 : i32
      %336 = arith.cmpi ne, %335, %c0_i32_161 : i32
      %c0_i32_162 = arith.constant 0 : i32
      %337 = arith.cmpi slt, %335, %c0_i32_162 : i32
      %c0_i32_163 = arith.constant 0 : i32
      %338 = arith.cmpi slt, %334, %c0_i32_163 : i32
      %339 = arith.xori %337, %338 : i1
      %340 = arith.andi %339, %336 : i1
      %341 = arith.addi %335, %334 : i32
      %342 = arith.select %340, %341, %335 : i32
      %c0_i32_164 = arith.constant 0 : i32
      %343 = tpu.memref_slice %arg9[%332, %c0_i32_164] : memref<100x128xf32, #tpu.memory_space<any>> -> memref<1x128xf32, #tpu.memory_space<any>>
      %c0_i32_165 = arith.constant 0 : i32
      %344 = tpu.memref_slice %arg11[%2, %c7_i32_157, %c0_i32_165] : memref<2x8x128xf32, #tpu.memory_space<vmem>> -> memref<1x1x128xf32, #tpu.memory_space<vmem>>
      %345 = tpu.memref_squeeze %344 : memref<1x1x128xf32, #tpu.memory_space<vmem>> -> memref<1x128xf32, #tpu.memory_space<vmem>>
      %346 = tpu.memref_slice %arg12[%2, %342] : memref<2x16x!tpu.dma_semaphore, #tpu.memory_space<semaphore_mem>> -> memref<1x1x!tpu.dma_semaphore, #tpu.memory_space<semaphore_mem>>
      %347 = tpu.memref_squeeze %346 : memref<1x1x!tpu.dma_semaphore, #tpu.memory_space<semaphore_mem>> -> memref<!tpu.dma_semaphore, #tpu.memory_space<semaphore_mem>>
      tpu.enqueue_dma source(%343 : memref<1x128xf32, #tpu.memory_space<any>>) target(%345 : memref<1x128xf32, #tpu.memory_space<vmem>>) target_semaphore(%347 : memref<!tpu.dma_semaphore, #tpu.memory_space<semaphore_mem>>)
      %c8_i32_166 = arith.constant 8 : i32
    } else {
    }
    %c1_i32_1 = arith.constant 1 : i32
    %6 = arith.addi %arg1, %c1_i32_1 : i32
    %c2_i32_2 = arith.constant 2 : i32
    %7 = arith.cmpi slt, %6, %c2_i32_2 : i32
    %8 = arith.extui %7 : i1 to i32
    %c0_i32_3 = arith.constant 0 : i32
    %9 = arith.cmpi ne, %8, %c0_i32_3 : i32
    scf.if %9 {
      %c1_i32_93 = arith.constant 1 : i32
      %203 = arith.addi %1, %c1_i32_93 : i32
      %c1_i32_94 = arith.constant 1 : i32
      %204 = arith.subi %c1_i32_94, %2 : i32
      %c8_i32_95 = arith.constant 8 : i32
      %205 = arith.muli %203, %c8_i32_95 : i32
      %c0_i32_96 = arith.constant 0 : i32
      %206 = arith.addi %205, %c0_i32_96 : i32
      %207 = arith.index_cast %206 : i32 to index
      %208 = memref.load %arg2[%207] : memref<32xi32, #tpu.memory_space<smem>>
      %c16_i32_97 = arith.constant 16 : i32
      %c0_i32_98 = arith.constant 0 : i32
      %209 = arith.cmpi eq, %c16_i32_97, %c0_i32_98 : i32
      %c1_i32_99 = arith.constant 1 : i32
      %210 = arith.select %209, %c1_i32_99, %c16_i32_97 : i32
      %211 = arith.remsi %c0_i32_96, %210 : i32
      %c0_i32_100 = arith.constant 0 : i32
      %212 = arith.cmpi ne, %211, %c0_i32_100 : i32
      %c0_i32_101 = arith.constant 0 : i32
      %213 = arith.cmpi slt, %211, %c0_i32_101 : i32
      %c0_i32_102 = arith.constant 0 : i32
      %214 = arith.cmpi slt, %210, %c0_i32_102 : i32
      %215 = arith.xori %213, %214 : i1
      %216 = arith.andi %215, %212 : i1
      %217 = arith.addi %211, %210 : i32
      %218 = arith.select %216, %217, %211 : i32
      %c0_i32_103 = arith.constant 0 : i32
      %219 = tpu.memref_slice %arg9[%208, %c0_i32_103] : memref<100x128xf32, #tpu.memory_space<any>> -> memref<1x128xf32, #tpu.memory_space<any>>
      %c0_i32_104 = arith.constant 0 : i32
      %220 = tpu.memref_slice %arg11[%204, %c0_i32_96, %c0_i32_104] : memref<2x8x128xf32, #tpu.memory_space<vmem>> -> memref<1x1x128xf32, #tpu.memory_space<vmem>>
      %221 = tpu.memref_squeeze %220 : memref<1x1x128xf32, #tpu.memory_space<vmem>> -> memref<1x128xf32, #tpu.memory_space<vmem>>
      %222 = tpu.memref_slice %arg12[%204, %218] : memref<2x16x!tpu.dma_semaphore, #tpu.memory_space<semaphore_mem>> -> memref<1x1x!tpu.dma_semaphore, #tpu.memory_space<semaphore_mem>>
      %223 = tpu.memref_squeeze %222 : memref<1x1x!tpu.dma_semaphore, #tpu.memory_space<semaphore_mem>> -> memref<!tpu.dma_semaphore, #tpu.memory_space<semaphore_mem>>
      tpu.enqueue_dma source(%219 : memref<1x128xf32, #tpu.memory_space<any>>) target(%221 : memref<1x128xf32, #tpu.memory_space<vmem>>) target_semaphore(%223 : memref<!tpu.dma_semaphore, #tpu.memory_space<semaphore_mem>>)
      %c1_i32_105 = arith.constant 1 : i32
      %224 = arith.addi %205, %c1_i32_105 : i32
      %225 = arith.index_cast %224 : i32 to index
      %226 = memref.load %arg2[%225] : memref<32xi32, #tpu.memory_space<smem>>
      %c16_i32_106 = arith.constant 16 : i32
      %c0_i32_107 = arith.constant 0 : i32
      %227 = arith.cmpi eq, %c16_i32_106, %c0_i32_107 : i32
      %c1_i32_108 = arith.constant 1 : i32
      %228 = arith.select %227, %c1_i32_108, %c16_i32_106 : i32
      %229 = arith.remsi %c1_i32_105, %228 : i32
      %c0_i32_109 = arith.constant 0 : i32
      %230 = arith.cmpi ne, %229, %c0_i32_109 : i32
      %c0_i32_110 = arith.constant 0 : i32
      %231 = arith.cmpi slt, %229, %c0_i32_110 : i32
      %c0_i32_111 = arith.constant 0 : i32
      %232 = arith.cmpi slt, %228, %c0_i32_111 : i32
      %233 = arith.xori %231, %232 : i1
      %234 = arith.andi %233, %230 : i1
      %235 = arith.addi %229, %228 : i32
      %236 = arith.select %234, %235, %229 : i32
      %c0_i32_112 = arith.constant 0 : i32
      %237 = tpu.memref_slice %arg9[%226, %c0_i32_112] : memref<100x128xf32, #tpu.memory_space<any>> -> memref<1x128xf32, #tpu.memory_space<any>>
      %c0_i32_113 = arith.constant 0 : i32
      %238 = tpu.memref_slice %arg11[%204, %c1_i32_105, %c0_i32_113] : memref<2x8x128xf32, #tpu.memory_space<vmem>> -> memref<1x1x128xf32, #tpu.memory_space<vmem>>
      %239 = tpu.memref_squeeze %238 : memref<1x1x128xf32, #tpu.memory_space<vmem>> -> memref<1x128xf32, #tpu.memory_space<vmem>>
      %240 = tpu.memref_slice %arg12[%204, %236] : memref<2x16x!tpu.dma_semaphore, #tpu.memory_space<semaphore_mem>> -> memref<1x1x!tpu.dma_semaphore, #tpu.memory_space<semaphore_mem>>
      %241 = tpu.memref_squeeze %240 : memref<1x1x!tpu.dma_semaphore, #tpu.memory_space<semaphore_mem>> -> memref<!tpu.dma_semaphore, #tpu.memory_space<semaphore_mem>>
      tpu.enqueue_dma source(%237 : memref<1x128xf32, #tpu.memory_space<any>>) target(%239 : memref<1x128xf32, #tpu.memory_space<vmem>>) target_semaphore(%241 : memref<!tpu.dma_semaphore, #tpu.memory_space<semaphore_mem>>)
      %c2_i32_114 = arith.constant 2 : i32
      %242 = arith.addi %205, %c2_i32_114 : i32
      %243 = arith.index_cast %242 : i32 to index
      %244 = memref.load %arg2[%243] : memref<32xi32, #tpu.memory_space<smem>>
      %c16_i32_115 = arith.constant 16 : i32
      %c0_i32_116 = arith.constant 0 : i32
      %245 = arith.cmpi eq, %c16_i32_115, %c0_i32_116 : i32
      %c1_i32_117 = arith.constant 1 : i32
      %246 = arith.select %245, %c1_i32_117, %c16_i32_115 : i32
      %247 = arith.remsi %c2_i32_114, %246 : i32
      %c0_i32_118 = arith.constant 0 : i32
      %248 = arith.cmpi ne, %247, %c0_i32_118 : i32
      %c0_i32_119 = arith.constant 0 : i32
      %249 = arith.cmpi slt, %247, %c0_i32_119 : i32
      %c0_i32_120 = arith.constant 0 : i32
      %250 = arith.cmpi slt, %246, %c0_i32_120 : i32
      %251 = arith.xori %249, %250 : i1
      %252 = arith.andi %251, %248 : i1
      %253 = arith.addi %247, %246 : i32
      %254 = arith.select %252, %253, %247 : i32
      %c0_i32_121 = arith.constant 0 : i32
      %255 = tpu.memref_slice %arg9[%244, %c0_i32_121] : memref<100x128xf32, #tpu.memory_space<any>> -> memref<1x128xf32, #tpu.memory_space<any>>
      %c0_i32_122 = arith.constant 0 : i32
      %256 = tpu.memref_slice %arg11[%204, %c2_i32_114, %c0_i32_122] : memref<2x8x128xf32, #tpu.memory_space<vmem>> -> memref<1x1x128xf32, #tpu.memory_space<vmem>>
      %257 = tpu.memref_squeeze %256 : memref<1x1x128xf32, #tpu.memory_space<vmem>> -> memref<1x128xf32, #tpu.memory_space<vmem>>
      %258 = tpu.memref_slice %arg12[%204, %254] : memref<2x16x!tpu.dma_semaphore, #tpu.memory_space<semaphore_mem>> -> memref<1x1x!tpu.dma_semaphore, #tpu.memory_space<semaphore_mem>>
      %259 = tpu.memref_squeeze %258 : memref<1x1x!tpu.dma_semaphore, #tpu.memory_space<semaphore_mem>> -> memref<!tpu.dma_semaphore, #tpu.memory_space<semaphore_mem>>
      tpu.enqueue_dma source(%255 : memref<1x128xf32, #tpu.memory_space<any>>) target(%257 : memref<1x128xf32, #tpu.memory_space<vmem>>) target_semaphore(%259 : memref<!tpu.dma_semaphore, #tpu.memory_space<semaphore_mem>>)
      %c3_i32_123 = arith.constant 3 : i32
      %260 = arith.addi %205, %c3_i32_123 : i32
      %261 = arith.index_cast %260 : i32 to index
      %262 = memref.load %arg2[%261] : memref<32xi32, #tpu.memory_space<smem>>
      %c16_i32_124 = arith.constant 16 : i32
      %c0_i32_125 = arith.constant 0 : i32
      %263 = arith.cmpi eq, %c16_i32_124, %c0_i32_125 : i32
      %c1_i32_126 = arith.constant 1 : i32
      %264 = arith.select %263, %c1_i32_126, %c16_i32_124 : i32
      %265 = arith.remsi %c3_i32_123, %264 : i32
      %c0_i32_127 = arith.constant 0 : i32
      %266 = arith.cmpi ne, %265, %c0_i32_127 : i32
      %c0_i32_128 = arith.constant 0 : i32
      %267 = arith.cmpi slt, %265, %c0_i32_128 : i32
      %c0_i32_129 = arith.constant 0 : i32
      %268 = arith.cmpi slt, %264, %c0_i32_129 : i32
      %269 = arith.xori %267, %268 : i1
      %270 = arith.andi %269, %266 : i1
      %271 = arith.addi %265, %264 : i32
      %272 = arith.select %270, %271, %265 : i32
      %c0_i32_130 = arith.constant 0 : i32
      %273 = tpu.memref_slice %arg9[%262, %c0_i32_130] : memref<100x128xf32, #tpu.memory_space<any>> -> memref<1x128xf32, #tpu.memory_space<any>>
      %c0_i32_131 = arith.constant 0 : i32
      %274 = tpu.memref_slice %arg11[%204, %c3_i32_123, %c0_i32_131] : memref<2x8x128xf32, #tpu.memory_space<vmem>> -> memref<1x1x128xf32, #tpu.memory_space<vmem>>
      %275 = tpu.memref_squeeze %274 : memref<1x1x128xf32, #tpu.memory_space<vmem>> -> memref<1x128xf32, #tpu.memory_space<vmem>>
      %276 = tpu.memref_slice %arg12[%204, %272] : memref<2x16x!tpu.dma_semaphore, #tpu.memory_space<semaphore_mem>> -> memref<1x1x!tpu.dma_semaphore, #tpu.memory_space<semaphore_mem>>
      %277 = tpu.memref_squeeze %276 : memref<1x1x!tpu.dma_semaphore, #tpu.memory_space<semaphore_mem>> -> memref<!tpu.dma_semaphore, #tpu.memory_space<semaphore_mem>>
      tpu.enqueue_dma source(%273 : memref<1x128xf32, #tpu.memory_space<any>>) target(%275 : memref<1x128xf32, #tpu.memory_space<vmem>>) target_semaphore(%277 : memref<!tpu.dma_semaphore, #tpu.memory_space<semaphore_mem>>)
      %c4_i32_132 = arith.constant 4 : i32
      %278 = arith.addi %205, %c4_i32_132 : i32
      %279 = arith.index_cast %278 : i32 to index
      %280 = memref.load %arg2[%279] : memref<32xi32, #tpu.memory_space<smem>>
      %c16_i32_133 = arith.constant 16 : i32
      %c0_i32_134 = arith.constant 0 : i32
      %281 = arith.cmpi eq, %c16_i32_133, %c0_i32_134 : i32
      %c1_i32_135 = arith.constant 1 : i32
      %282 = arith.select %281, %c1_i32_135, %c16_i32_133 : i32
      %283 = arith.remsi %c4_i32_132, %282 : i32
      %c0_i32_136 = arith.constant 0 : i32
      %284 = arith.cmpi ne, %283, %c0_i32_136 : i32
      %c0_i32_137 = arith.constant 0 : i32
      %285 = arith.cmpi slt, %283, %c0_i32_137 : i32
      %c0_i32_138 = arith.constant 0 : i32
      %286 = arith.cmpi slt, %282, %c0_i32_138 : i32
      %287 = arith.xori %285, %286 : i1
      %288 = arith.andi %287, %284 : i1
      %289 = arith.addi %283, %282 : i32
      %290 = arith.select %288, %289, %283 : i32
      %c0_i32_139 = arith.constant 0 : i32
      %291 = tpu.memref_slice %arg9[%280, %c0_i32_139] : memref<100x128xf32, #tpu.memory_space<any>> -> memref<1x128xf32, #tpu.memory_space<any>>
      %c0_i32_140 = arith.constant 0 : i32
      %292 = tpu.memref_slice %arg11[%204, %c4_i32_132, %c0_i32_140] : memref<2x8x128xf32, #tpu.memory_space<vmem>> -> memref<1x1x128xf32, #tpu.memory_space<vmem>>
      %293 = tpu.memref_squeeze %292 : memref<1x1x128xf32, #tpu.memory_space<vmem>> -> memref<1x128xf32, #tpu.memory_space<vmem>>
      %294 = tpu.memref_slice %arg12[%204, %290] : memref<2x16x!tpu.dma_semaphore, #tpu.memory_space<semaphore_mem>> -> memref<1x1x!tpu.dma_semaphore, #tpu.memory_space<semaphore_mem>>
      %295 = tpu.memref_squeeze %294 : memref<1x1x!tpu.dma_semaphore, #tpu.memory_space<semaphore_mem>> -> memref<!tpu.dma_semaphore, #tpu.memory_space<semaphore_mem>>
      tpu.enqueue_dma source(%291 : memref<1x128xf32, #tpu.memory_space<any>>) target(%293 : memref<1x128xf32, #tpu.memory_space<vmem>>) target_semaphore(%295 : memref<!tpu.dma_semaphore, #tpu.memory_space<semaphore_mem>>)
      %c5_i32_141 = arith.constant 5 : i32
      %296 = arith.addi %205, %c5_i32_141 : i32
      %297 = arith.index_cast %296 : i32 to index
      %298 = memref.load %arg2[%297] : memref<32xi32, #tpu.memory_space<smem>>
      %c16_i32_142 = arith.constant 16 : i32
      %c0_i32_143 = arith.constant 0 : i32
      %299 = arith.cmpi eq, %c16_i32_142, %c0_i32_143 : i32
      %c1_i32_144 = arith.constant 1 : i32
      %300 = arith.select %299, %c1_i32_144, %c16_i32_142 : i32
      %301 = arith.remsi %c5_i32_141, %300 : i32
      %c0_i32_145 = arith.constant 0 : i32
      %302 = arith.cmpi ne, %301, %c0_i32_145 : i32
      %c0_i32_146 = arith.constant 0 : i32
      %303 = arith.cmpi slt, %301, %c0_i32_146 : i32
      %c0_i32_147 = arith.constant 0 : i32
      %304 = arith.cmpi slt, %300, %c0_i32_147 : i32
      %305 = arith.xori %303, %304 : i1
      %306 = arith.andi %305, %302 : i1
      %307 = arith.addi %301, %300 : i32
      %308 = arith.select %306, %307, %301 : i32
      %c0_i32_148 = arith.constant 0 : i32
      %309 = tpu.memref_slice %arg9[%298, %c0_i32_148] : memref<100x128xf32, #tpu.memory_space<any>> -> memref<1x128xf32, #tpu.memory_space<any>>
      %c0_i32_149 = arith.constant 0 : i32
      %310 = tpu.memref_slice %arg11[%204, %c5_i32_141, %c0_i32_149] : memref<2x8x128xf32, #tpu.memory_space<vmem>> -> memref<1x1x128xf32, #tpu.memory_space<vmem>>
      %311 = tpu.memref_squeeze %310 : memref<1x1x128xf32, #tpu.memory_space<vmem>> -> memref<1x128xf32, #tpu.memory_space<vmem>>
      %312 = tpu.memref_slice %arg12[%204, %308] : memref<2x16x!tpu.dma_semaphore, #tpu.memory_space<semaphore_mem>> -> memref<1x1x!tpu.dma_semaphore, #tpu.memory_space<semaphore_mem>>
      %313 = tpu.memref_squeeze %312 : memref<1x1x!tpu.dma_semaphore, #tpu.memory_space<semaphore_mem>> -> memref<!tpu.dma_semaphore, #tpu.memory_space<semaphore_mem>>
      tpu.enqueue_dma source(%309 : memref<1x128xf32, #tpu.memory_space<any>>) target(%311 : memref<1x128xf32, #tpu.memory_space<vmem>>) target_semaphore(%313 : memref<!tpu.dma_semaphore, #tpu.memory_space<semaphore_mem>>)
      %c6_i32_150 = arith.constant 6 : i32
      %314 = arith.addi %205, %c6_i32_150 : i32
      %315 = arith.index_cast %314 : i32 to index
      %316 = memref.load %arg2[%315] : memref<32xi32, #tpu.memory_space<smem>>
      %c16_i32_151 = arith.constant 16 : i32
      %c0_i32_152 = arith.constant 0 : i32
      %317 = arith.cmpi eq, %c16_i32_151, %c0_i32_152 : i32
      %c1_i32_153 = arith.constant 1 : i32
      %318 = arith.select %317, %c1_i32_153, %c16_i32_151 : i32
      %319 = arith.remsi %c6_i32_150, %318 : i32
      %c0_i32_154 = arith.constant 0 : i32
      %320 = arith.cmpi ne, %319, %c0_i32_154 : i32
      %c0_i32_155 = arith.constant 0 : i32
      %321 = arith.cmpi slt, %319, %c0_i32_155 : i32
      %c0_i32_156 = arith.constant 0 : i32
      %322 = arith.cmpi slt, %318, %c0_i32_156 : i32
      %323 = arith.xori %321, %322 : i1
      %324 = arith.andi %323, %320 : i1
      %325 = arith.addi %319, %318 : i32
      %326 = arith.select %324, %325, %319 : i32
      %c0_i32_157 = arith.constant 0 : i32
      %327 = tpu.memref_slice %arg9[%316, %c0_i32_157] : memref<100x128xf32, #tpu.memory_space<any>> -> memref<1x128xf32, #tpu.memory_space<any>>
      %c0_i32_158 = arith.constant 0 : i32
      %328 = tpu.memref_slice %arg11[%204, %c6_i32_150, %c0_i32_158] : memref<2x8x128xf32, #tpu.memory_space<vmem>> -> memref<1x1x128xf32, #tpu.memory_space<vmem>>
      %329 = tpu.memref_squeeze %328 : memref<1x1x128xf32, #tpu.memory_space<vmem>> -> memref<1x128xf32, #tpu.memory_space<vmem>>
      %330 = tpu.memref_slice %arg12[%204, %326] : memref<2x16x!tpu.dma_semaphore, #tpu.memory_space<semaphore_mem>> -> memref<1x1x!tpu.dma_semaphore, #tpu.memory_space<semaphore_mem>>
      %331 = tpu.memref_squeeze %330 : memref<1x1x!tpu.dma_semaphore, #tpu.memory_space<semaphore_mem>> -> memref<!tpu.dma_semaphore, #tpu.memory_space<semaphore_mem>>
      tpu.enqueue_dma source(%327 : memref<1x128xf32, #tpu.memory_space<any>>) target(%329 : memref<1x128xf32, #tpu.memory_space<vmem>>) target_semaphore(%331 : memref<!tpu.dma_semaphore, #tpu.memory_space<semaphore_mem>>)
      %c7_i32_159 = arith.constant 7 : i32
      %332 = arith.addi %205, %c7_i32_159 : i32
      %333 = arith.index_cast %332 : i32 to index
      %334 = memref.load %arg2[%333] : memref<32xi32, #tpu.memory_space<smem>>
      %c16_i32_160 = arith.constant 16 : i32
      %c0_i32_161 = arith.constant 0 : i32
      %335 = arith.cmpi eq, %c16_i32_160, %c0_i32_161 : i32
      %c1_i32_162 = arith.constant 1 : i32
      %336 = arith.select %335, %c1_i32_162, %c16_i32_160 : i32
      %337 = arith.remsi %c7_i32_159, %336 : i32
      %c0_i32_163 = arith.constant 0 : i32
      %338 = arith.cmpi ne, %337, %c0_i32_163 : i32
      %c0_i32_164 = arith.constant 0 : i32
      %339 = arith.cmpi slt, %337, %c0_i32_164 : i32
      %c0_i32_165 = arith.constant 0 : i32
      %340 = arith.cmpi slt, %336, %c0_i32_165 : i32
      %341 = arith.xori %339, %340 : i1
      %342 = arith.andi %341, %338 : i1
      %343 = arith.addi %337, %336 : i32
      %344 = arith.select %342, %343, %337 : i32
      %c0_i32_166 = arith.constant 0 : i32
      %345 = tpu.memref_slice %arg9[%334, %c0_i32_166] : memref<100x128xf32, #tpu.memory_space<any>> -> memref<1x128xf32, #tpu.memory_space<any>>
      %c0_i32_167 = arith.constant 0 : i32
      %346 = tpu.memref_slice %arg11[%204, %c7_i32_159, %c0_i32_167] : memref<2x8x128xf32, #tpu.memory_space<vmem>> -> memref<1x1x128xf32, #tpu.memory_space<vmem>>
      %347 = tpu.memref_squeeze %346 : memref<1x1x128xf32, #tpu.memory_space<vmem>> -> memref<1x128xf32, #tpu.memory_space<vmem>>
      %348 = tpu.memref_slice %arg12[%204, %344] : memref<2x16x!tpu.dma_semaphore, #tpu.memory_space<semaphore_mem>> -> memref<1x1x!tpu.dma_semaphore, #tpu.memory_space<semaphore_mem>>
      %349 = tpu.memref_squeeze %348 : memref<1x1x!tpu.dma_semaphore, #tpu.memory_space<semaphore_mem>> -> memref<!tpu.dma_semaphore, #tpu.memory_space<semaphore_mem>>
      tpu.enqueue_dma source(%345 : memref<1x128xf32, #tpu.memory_space<any>>) target(%347 : memref<1x128xf32, #tpu.memory_space<vmem>>) target_semaphore(%349 : memref<!tpu.dma_semaphore, #tpu.memory_space<semaphore_mem>>)
      %c8_i32_168 = arith.constant 8 : i32
    } else {
    }
    %c8_i32 = arith.constant 8 : i32
    %10 = arith.muli %1, %c8_i32 : i32
    %c0_i32_4 = arith.constant 0 : i32
    %11 = arith.addi %10, %c0_i32_4 : i32
    %12 = arith.index_cast %11 : i32 to index
    %13 = memref.load %arg2[%12] : memref<32xi32, #tpu.memory_space<smem>>
    %c16_i32 = arith.constant 16 : i32
    %c0_i32_5 = arith.constant 0 : i32
    %14 = arith.cmpi eq, %c16_i32, %c0_i32_5 : i32
    %c1_i32_6 = arith.constant 1 : i32
    %15 = arith.select %14, %c1_i32_6, %c16_i32 : i32
    %16 = arith.remsi %c0_i32_4, %15 : i32
    %c0_i32_7 = arith.constant 0 : i32
    %17 = arith.cmpi ne, %16, %c0_i32_7 : i32
    %c0_i32_8 = arith.constant 0 : i32
    %18 = arith.cmpi slt, %16, %c0_i32_8 : i32
    %c0_i32_9 = arith.constant 0 : i32
    %19 = arith.cmpi slt, %15, %c0_i32_9 : i32
    %20 = arith.xori %18, %19 : i1
    %21 = arith.andi %20, %17 : i1
    %22 = arith.addi %16, %15 : i32
    %23 = arith.select %21, %22, %16 : i32
    %c0_i32_10 = arith.constant 0 : i32
    %24 = tpu.memref_slice %arg9[%13, %c0_i32_10] : memref<100x128xf32, #tpu.memory_space<any>> -> memref<1x128xf32, #tpu.memory_space<any>>
    %c0_i32_11 = arith.constant 0 : i32
    %25 = tpu.memref_slice %arg11[%2, %c0_i32_4, %c0_i32_11] : memref<2x8x128xf32, #tpu.memory_space<vmem>> -> memref<1x1x128xf32, #tpu.memory_space<vmem>>
    %26 = tpu.memref_squeeze %25 : memref<1x1x128xf32, #tpu.memory_space<vmem>> -> memref<1x128xf32, #tpu.memory_space<vmem>>
    %27 = tpu.memref_slice %arg12[%2, %23] : memref<2x16x!tpu.dma_semaphore, #tpu.memory_space<semaphore_mem>> -> memref<1x1x!tpu.dma_semaphore, #tpu.memory_space<semaphore_mem>>
    %28 = tpu.memref_squeeze %27 : memref<1x1x!tpu.dma_semaphore, #tpu.memory_space<semaphore_mem>> -> memref<!tpu.dma_semaphore, #tpu.memory_space<semaphore_mem>>
    tpu.wait_dma2 semaphore(%28 : memref<!tpu.dma_semaphore, #tpu.memory_space<semaphore_mem>>) src(%24 : memref<1x128xf32, #tpu.memory_space<any>>) dst(%26 : memref<1x128xf32, #tpu.memory_space<vmem>>)
    %c1_i32_12 = arith.constant 1 : i32
    %29 = arith.addi %10, %c1_i32_12 : i32
    %30 = arith.index_cast %29 : i32 to index
    %31 = memref.load %arg2[%30] : memref<32xi32, #tpu.memory_space<smem>>
    %c16_i32_13 = arith.constant 16 : i32
    %c0_i32_14 = arith.constant 0 : i32
    %32 = arith.cmpi eq, %c16_i32_13, %c0_i32_14 : i32
    %c1_i32_15 = arith.constant 1 : i32
    %33 = arith.select %32, %c1_i32_15, %c16_i32_13 : i32
    %34 = arith.remsi %c1_i32_12, %33 : i32
    %c0_i32_16 = arith.constant 0 : i32
    %35 = arith.cmpi ne, %34, %c0_i32_16 : i32
    %c0_i32_17 = arith.constant 0 : i32
    %36 = arith.cmpi slt, %34, %c0_i32_17 : i32
    %c0_i32_18 = arith.constant 0 : i32
    %37 = arith.cmpi slt, %33, %c0_i32_18 : i32
    %38 = arith.xori %36, %37 : i1
    %39 = arith.andi %38, %35 : i1
    %40 = arith.addi %34, %33 : i32
    %41 = arith.select %39, %40, %34 : i32
    %c0_i32_19 = arith.constant 0 : i32
    %42 = tpu.memref_slice %arg9[%31, %c0_i32_19] : memref<100x128xf32, #tpu.memory_space<any>> -> memref<1x128xf32, #tpu.memory_space<any>>
    %c0_i32_20 = arith.constant 0 : i32
    %43 = tpu.memref_slice %arg11[%2, %c1_i32_12, %c0_i32_20] : memref<2x8x128xf32, #tpu.memory_space<vmem>> -> memref<1x1x128xf32, #tpu.memory_space<vmem>>
    %44 = tpu.memref_squeeze %43 : memref<1x1x128xf32, #tpu.memory_space<vmem>> -> memref<1x128xf32, #tpu.memory_space<vmem>>
    %45 = tpu.memref_slice %arg12[%2, %41] : memref<2x16x!tpu.dma_semaphore, #tpu.memory_space<semaphore_mem>> -> memref<1x1x!tpu.dma_semaphore, #tpu.memory_space<semaphore_mem>>
    %46 = tpu.memref_squeeze %45 : memref<1x1x!tpu.dma_semaphore, #tpu.memory_space<semaphore_mem>> -> memref<!tpu.dma_semaphore, #tpu.memory_space<semaphore_mem>>
    tpu.wait_dma2 semaphore(%46 : memref<!tpu.dma_semaphore, #tpu.memory_space<semaphore_mem>>) src(%42 : memref<1x128xf32, #tpu.memory_space<any>>) dst(%44 : memref<1x128xf32, #tpu.memory_space<vmem>>)
    %c2_i32_21 = arith.constant 2 : i32
    %47 = arith.addi %10, %c2_i32_21 : i32
    %48 = arith.index_cast %47 : i32 to index
    %49 = memref.load %arg2[%48] : memref<32xi32, #tpu.memory_space<smem>>
    %c16_i32_22 = arith.constant 16 : i32
    %c0_i32_23 = arith.constant 0 : i32
    %50 = arith.cmpi eq, %c16_i32_22, %c0_i32_23 : i32
    %c1_i32_24 = arith.constant 1 : i32
    %51 = arith.select %50, %c1_i32_24, %c16_i32_22 : i32
    %52 = arith.remsi %c2_i32_21, %51 : i32
    %c0_i32_25 = arith.constant 0 : i32
    %53 = arith.cmpi ne, %52, %c0_i32_25 : i32
    %c0_i32_26 = arith.constant 0 : i32
    %54 = arith.cmpi slt, %52, %c0_i32_26 : i32
    %c0_i32_27 = arith.constant 0 : i32
    %55 = arith.cmpi slt, %51, %c0_i32_27 : i32
    %56 = arith.xori %54, %55 : i1
    %57 = arith.andi %56, %53 : i1
    %58 = arith.addi %52, %51 : i32
    %59 = arith.select %57, %58, %52 : i32
    %c0_i32_28 = arith.constant 0 : i32
    %60 = tpu.memref_slice %arg9[%49, %c0_i32_28] : memref<100x128xf32, #tpu.memory_space<any>> -> memref<1x128xf32, #tpu.memory_space<any>>
    %c0_i32_29 = arith.constant 0 : i32
    %61 = tpu.memref_slice %arg11[%2, %c2_i32_21, %c0_i32_29] : memref<2x8x128xf32, #tpu.memory_space<vmem>> -> memref<1x1x128xf32, #tpu.memory_space<vmem>>
    %62 = tpu.memref_squeeze %61 : memref<1x1x128xf32, #tpu.memory_space<vmem>> -> memref<1x128xf32, #tpu.memory_space<vmem>>
    %63 = tpu.memref_slice %arg12[%2, %59] : memref<2x16x!tpu.dma_semaphore, #tpu.memory_space<semaphore_mem>> -> memref<1x1x!tpu.dma_semaphore, #tpu.memory_space<semaphore_mem>>
    %64 = tpu.memref_squeeze %63 : memref<1x1x!tpu.dma_semaphore, #tpu.memory_space<semaphore_mem>> -> memref<!tpu.dma_semaphore, #tpu.memory_space<semaphore_mem>>
    tpu.wait_dma2 semaphore(%64 : memref<!tpu.dma_semaphore, #tpu.memory_space<semaphore_mem>>) src(%60 : memref<1x128xf32, #tpu.memory_space<any>>) dst(%62 : memref<1x128xf32, #tpu.memory_space<vmem>>)
    %c3_i32 = arith.constant 3 : i32
    %65 = arith.addi %10, %c3_i32 : i32
    %66 = arith.index_cast %65 : i32 to index
    %67 = memref.load %arg2[%66] : memref<32xi32, #tpu.memory_space<smem>>
    %c16_i32_30 = arith.constant 16 : i32
    %c0_i32_31 = arith.constant 0 : i32
    %68 = arith.cmpi eq, %c16_i32_30, %c0_i32_31 : i32
    %c1_i32_32 = arith.constant 1 : i32
    %69 = arith.select %68, %c1_i32_32, %c16_i32_30 : i32
    %70 = arith.remsi %c3_i32, %69 : i32
    %c0_i32_33 = arith.constant 0 : i32
    %71 = arith.cmpi ne, %70, %c0_i32_33 : i32
    %c0_i32_34 = arith.constant 0 : i32
    %72 = arith.cmpi slt, %70, %c0_i32_34 : i32
    %c0_i32_35 = arith.constant 0 : i32
    %73 = arith.cmpi slt, %69, %c0_i32_35 : i32
    %74 = arith.xori %72, %73 : i1
    %75 = arith.andi %74, %71 : i1
    %76 = arith.addi %70, %69 : i32
    %77 = arith.select %75, %76, %70 : i32
    %c0_i32_36 = arith.constant 0 : i32
    %78 = tpu.memref_slice %arg9[%67, %c0_i32_36] : memref<100x128xf32, #tpu.memory_space<any>> -> memref<1x128xf32, #tpu.memory_space<any>>
    %c0_i32_37 = arith.constant 0 : i32
    %79 = tpu.memref_slice %arg11[%2, %c3_i32, %c0_i32_37] : memref<2x8x128xf32, #tpu.memory_space<vmem>> -> memref<1x1x128xf32, #tpu.memory_space<vmem>>
    %80 = tpu.memref_squeeze %79 : memref<1x1x128xf32, #tpu.memory_space<vmem>> -> memref<1x128xf32, #tpu.memory_space<vmem>>
    %81 = tpu.memref_slice %arg12[%2, %77] : memref<2x16x!tpu.dma_semaphore, #tpu.memory_space<semaphore_mem>> -> memref<1x1x!tpu.dma_semaphore, #tpu.memory_space<semaphore_mem>>
    %82 = tpu.memref_squeeze %81 : memref<1x1x!tpu.dma_semaphore, #tpu.memory_space<semaphore_mem>> -> memref<!tpu.dma_semaphore, #tpu.memory_space<semaphore_mem>>
    tpu.wait_dma2 semaphore(%82 : memref<!tpu.dma_semaphore, #tpu.memory_space<semaphore_mem>>) src(%78 : memref<1x128xf32, #tpu.memory_space<any>>) dst(%80 : memref<1x128xf32, #tpu.memory_space<vmem>>)
    %c4_i32 = arith.constant 4 : i32
    %83 = arith.addi %10, %c4_i32 : i32
    %84 = arith.index_cast %83 : i32 to index
    %85 = memref.load %arg2[%84] : memref<32xi32, #tpu.memory_space<smem>>
    %c16_i32_38 = arith.constant 16 : i32
    %c0_i32_39 = arith.constant 0 : i32
    %86 = arith.cmpi eq, %c16_i32_38, %c0_i32_39 : i32
    %c1_i32_40 = arith.constant 1 : i32
    %87 = arith.select %86, %c1_i32_40, %c16_i32_38 : i32
    %88 = arith.remsi %c4_i32, %87 : i32
    %c0_i32_41 = arith.constant 0 : i32
    %89 = arith.cmpi ne, %88, %c0_i32_41 : i32
    %c0_i32_42 = arith.constant 0 : i32
    %90 = arith.cmpi slt, %88, %c0_i32_42 : i32
    %c0_i32_43 = arith.constant 0 : i32
    %91 = arith.cmpi slt, %87, %c0_i32_43 : i32
    %92 = arith.xori %90, %91 : i1
    %93 = arith.andi %92, %89 : i1
    %94 = arith.addi %88, %87 : i32
    %95 = arith.select %93, %94, %88 : i32
    %c0_i32_44 = arith.constant 0 : i32
    %96 = tpu.memref_slice %arg9[%85, %c0_i32_44] : memref<100x128xf32, #tpu.memory_space<any>> -> memref<1x128xf32, #tpu.memory_space<any>>
    %c0_i32_45 = arith.constant 0 : i32
    %97 = tpu.memref_slice %arg11[%2, %c4_i32, %c0_i32_45] : memref<2x8x128xf32, #tpu.memory_space<vmem>> -> memref<1x1x128xf32, #tpu.memory_space<vmem>>
    %98 = tpu.memref_squeeze %97 : memref<1x1x128xf32, #tpu.memory_space<vmem>> -> memref<1x128xf32, #tpu.memory_space<vmem>>
    %99 = tpu.memref_slice %arg12[%2, %95] : memref<2x16x!tpu.dma_semaphore, #tpu.memory_space<semaphore_mem>> -> memref<1x1x!tpu.dma_semaphore, #tpu.memory_space<semaphore_mem>>
    %100 = tpu.memref_squeeze %99 : memref<1x1x!tpu.dma_semaphore, #tpu.memory_space<semaphore_mem>> -> memref<!tpu.dma_semaphore, #tpu.memory_space<semaphore_mem>>
    tpu.wait_dma2 semaphore(%100 : memref<!tpu.dma_semaphore, #tpu.memory_space<semaphore_mem>>) src(%96 : memref<1x128xf32, #tpu.memory_space<any>>) dst(%98 : memref<1x128xf32, #tpu.memory_space<vmem>>)
    %c5_i32 = arith.constant 5 : i32
    %101 = arith.addi %10, %c5_i32 : i32
    %102 = arith.index_cast %101 : i32 to index
    %103 = memref.load %arg2[%102] : memref<32xi32, #tpu.memory_space<smem>>
    %c16_i32_46 = arith.constant 16 : i32
    %c0_i32_47 = arith.constant 0 : i32
    %104 = arith.cmpi eq, %c16_i32_46, %c0_i32_47 : i32
    %c1_i32_48 = arith.constant 1 : i32
    %105 = arith.select %104, %c1_i32_48, %c16_i32_46 : i32
    %106 = arith.remsi %c5_i32, %105 : i32
    %c0_i32_49 = arith.constant 0 : i32
    %107 = arith.cmpi ne, %106, %c0_i32_49 : i32
    %c0_i32_50 = arith.constant 0 : i32
    %108 = arith.cmpi slt, %106, %c0_i32_50 : i32
    %c0_i32_51 = arith.constant 0 : i32
    %109 = arith.cmpi slt, %105, %c0_i32_51 : i32
    %110 = arith.xori %108, %109 : i1
    %111 = arith.andi %110, %107 : i1
    %112 = arith.addi %106, %105 : i32
    %113 = arith.select %111, %112, %106 : i32
    %c0_i32_52 = arith.constant 0 : i32
    %114 = tpu.memref_slice %arg9[%103, %c0_i32_52] : memref<100x128xf32, #tpu.memory_space<any>> -> memref<1x128xf32, #tpu.memory_space<any>>
    %c0_i32_53 = arith.constant 0 : i32
    %115 = tpu.memref_slice %arg11[%2, %c5_i32, %c0_i32_53] : memref<2x8x128xf32, #tpu.memory_space<vmem>> -> memref<1x1x128xf32, #tpu.memory_space<vmem>>
    %116 = tpu.memref_squeeze %115 : memref<1x1x128xf32, #tpu.memory_space<vmem>> -> memref<1x128xf32, #tpu.memory_space<vmem>>
    %117 = tpu.memref_slice %arg12[%2, %113] : memref<2x16x!tpu.dma_semaphore, #tpu.memory_space<semaphore_mem>> -> memref<1x1x!tpu.dma_semaphore, #tpu.memory_space<semaphore_mem>>
    %118 = tpu.memref_squeeze %117 : memref<1x1x!tpu.dma_semaphore, #tpu.memory_space<semaphore_mem>> -> memref<!tpu.dma_semaphore, #tpu.memory_space<semaphore_mem>>
    tpu.wait_dma2 semaphore(%118 : memref<!tpu.dma_semaphore, #tpu.memory_space<semaphore_mem>>) src(%114 : memref<1x128xf32, #tpu.memory_space<any>>) dst(%116 : memref<1x128xf32, #tpu.memory_space<vmem>>)
    %c6_i32 = arith.constant 6 : i32
    %119 = arith.addi %10, %c6_i32 : i32
    %120 = arith.index_cast %119 : i32 to index
    %121 = memref.load %arg2[%120] : memref<32xi32, #tpu.memory_space<smem>>
    %c16_i32_54 = arith.constant 16 : i32
    %c0_i32_55 = arith.constant 0 : i32
    %122 = arith.cmpi eq, %c16_i32_54, %c0_i32_55 : i32
    %c1_i32_56 = arith.constant 1 : i32
    %123 = arith.select %122, %c1_i32_56, %c16_i32_54 : i32
    %124 = arith.remsi %c6_i32, %123 : i32
    %c0_i32_57 = arith.constant 0 : i32
    %125 = arith.cmpi ne, %124, %c0_i32_57 : i32
    %c0_i32_58 = arith.constant 0 : i32
    %126 = arith.cmpi slt, %124, %c0_i32_58 : i32
    %c0_i32_59 = arith.constant 0 : i32
    %127 = arith.cmpi slt, %123, %c0_i32_59 : i32
    %128 = arith.xori %126, %127 : i1
    %129 = arith.andi %128, %125 : i1
    %130 = arith.addi %124, %123 : i32
    %131 = arith.select %129, %130, %124 : i32
    %c0_i32_60 = arith.constant 0 : i32
    %132 = tpu.memref_slice %arg9[%121, %c0_i32_60] : memref<100x128xf32, #tpu.memory_space<any>> -> memref<1x128xf32, #tpu.memory_space<any>>
    %c0_i32_61 = arith.constant 0 : i32
    %133 = tpu.memref_slice %arg11[%2, %c6_i32, %c0_i32_61] : memref<2x8x128xf32, #tpu.memory_space<vmem>> -> memref<1x1x128xf32, #tpu.memory_space<vmem>>
    %134 = tpu.memref_squeeze %133 : memref<1x1x128xf32, #tpu.memory_space<vmem>> -> memref<1x128xf32, #tpu.memory_space<vmem>>
    %135 = tpu.memref_slice %arg12[%2, %131] : memref<2x16x!tpu.dma_semaphore, #tpu.memory_space<semaphore_mem>> -> memref<1x1x!tpu.dma_semaphore, #tpu.memory_space<semaphore_mem>>
    %136 = tpu.memref_squeeze %135 : memref<1x1x!tpu.dma_semaphore, #tpu.memory_space<semaphore_mem>> -> memref<!tpu.dma_semaphore, #tpu.memory_space<semaphore_mem>>
    tpu.wait_dma2 semaphore(%136 : memref<!tpu.dma_semaphore, #tpu.memory_space<semaphore_mem>>) src(%132 : memref<1x128xf32, #tpu.memory_space<any>>) dst(%134 : memref<1x128xf32, #tpu.memory_space<vmem>>)
    %c7_i32 = arith.constant 7 : i32
    %137 = arith.addi %10, %c7_i32 : i32
    %138 = arith.index_cast %137 : i32 to index
    %139 = memref.load %arg2[%138] : memref<32xi32, #tpu.memory_space<smem>>
    %c16_i32_62 = arith.constant 16 : i32
    %c0_i32_63 = arith.constant 0 : i32
    %140 = arith.cmpi eq, %c16_i32_62, %c0_i32_63 : i32
    %c1_i32_64 = arith.constant 1 : i32
    %141 = arith.select %140, %c1_i32_64, %c16_i32_62 : i32
    %142 = arith.remsi %c7_i32, %141 : i32
    %c0_i32_65 = arith.constant 0 : i32
    %143 = arith.cmpi ne, %142, %c0_i32_65 : i32
    %c0_i32_66 = arith.constant 0 : i32
    %144 = arith.cmpi slt, %142, %c0_i32_66 : i32
    %c0_i32_67 = arith.constant 0 : i32
    %145 = arith.cmpi slt, %141, %c0_i32_67 : i32
    %146 = arith.xori %144, %145 : i1
    %147 = arith.andi %146, %143 : i1
    %148 = arith.addi %142, %141 : i32
    %149 = arith.select %147, %148, %142 : i32
    %c0_i32_68 = arith.constant 0 : i32
    %150 = tpu.memref_slice %arg9[%139, %c0_i32_68] : memref<100x128xf32, #tpu.memory_space<any>> -> memref<1x128xf32, #tpu.memory_space<any>>
    %c0_i32_69 = arith.constant 0 : i32
    %151 = tpu.memref_slice %arg11[%2, %c7_i32, %c0_i32_69] : memref<2x8x128xf32, #tpu.memory_space<vmem>> -> memref<1x1x128xf32, #tpu.memory_space<vmem>>
    %152 = tpu.memref_squeeze %151 : memref<1x1x128xf32, #tpu.memory_space<vmem>> -> memref<1x128xf32, #tpu.memory_space<vmem>>
    %153 = tpu.memref_slice %arg12[%2, %149] : memref<2x16x!tpu.dma_semaphore, #tpu.memory_space<semaphore_mem>> -> memref<1x1x!tpu.dma_semaphore, #tpu.memory_space<semaphore_mem>>
    %154 = tpu.memref_squeeze %153 : memref<1x1x!tpu.dma_semaphore, #tpu.memory_space<semaphore_mem>> -> memref<!tpu.dma_semaphore, #tpu.memory_space<semaphore_mem>>
    tpu.wait_dma2 semaphore(%154 : memref<!tpu.dma_semaphore, #tpu.memory_space<semaphore_mem>>) src(%150 : memref<1x128xf32, #tpu.memory_space<any>>) dst(%152 : memref<1x128xf32, #tpu.memory_space<vmem>>)
    %c8_i32_70 = arith.constant 8 : i32
    %155 = tpu.iota {dimensions = array<i32: 1>} : vector<8x32xi32>
    %c0 = arith.constant 0 : index
    %c0_71 = arith.constant 0 : index
    %156 = vector.load %arg3[%c0, %c0_71] : memref<8x1xi32, #tpu.memory_space<vmem>>, vector<8x1xi32>
    %157 = vector.broadcast %156 : vector<8x1xi32> to vector<8x32xi32>
    %158 = arith.cmpi eq, %155, %157 : vector<8x32xi32>
    %159 = arith.extui %158 : vector<8x32xi1> to vector<8x32xi32>
    %160 = arith.sitofp %159 : vector<8x32xi32> to vector<8x32xf32>
    %c0_72 = arith.constant 0 : index
    %c0_73 = arith.constant 0 : index
    %161 = vector.load %arg5[%c0_72, %c0_73] : memref<32x128xf32, #tpu.memory_space<vmem>>, vector<32x128xf32>
    %cst = arith.constant dense<0.000000e+00> : vector<8x128xf32>
    %162 = tpu.matmul %160, %161, %cst {dimension_numbers = #tpu.dot_dimension_numbers<[1], [0], [0], [1], [0, 0, 1, 1], [], []>} : vector<8x32xf32>, vector<32x128xf32>, vector<8x128xf32> -> vector<8x128xf32>
    %c0_74 = arith.constant 0 : index
    %c0_75 = arith.constant 0 : index
    %163 = vector.load %arg4[%c0_74, %c0_75] : memref<8x1xi32, #tpu.memory_space<vmem>>, vector<8x1xi32>
    %c0_76 = arith.constant 0 : index
    %c0_77 = arith.constant 0 : index
    %164 = vector.load %arg6[%c0_76, %c0_77] : memref<8x128xf32, #tpu.memory_space<vmem>>, vector<1x128xf32>
    %165 = vector.shape_cast %164 : vector<1x128xf32> to vector<1x128xf32>
    %166 = vector.broadcast %165 : vector<1x128xf32> to vector<8x128xf32>
    %c1 = arith.constant 1 : index
    %c0_78 = arith.constant 0 : index
    %167 = vector.load %arg6[%c1, %c0_78] : memref<8x128xf32, #tpu.memory_space<vmem>>, vector<1x128xf32>
    %c1_i32_79 = arith.constant 1 : i32
    %168 = vector.broadcast %c1_i32_79 : i32 to vector<8x1xi32>
    %169 = arith.cmpi eq, %163, %168 : vector<8x1xi32>
    %170 = vector.shape_cast %169 : vector<8x1xi1> to vector<8x1xi1>
    %171 = vector.broadcast %170 : vector<8x1xi1> to vector<8x128xi1>
    %172 = vector.shape_cast %167 : vector<1x128xf32> to vector<1x128xf32>
    %173 = vector.broadcast %172 : vector<1x128xf32> to vector<8x128xf32>
    %174 = arith.select %171, %173, %166 : vector<8x128xi1>, vector<8x128xf32>
    %175 = arith.index_cast %2 : i32 to index
    %c0_80 = arith.constant 0 : index
    %c0_81 = arith.constant 0 : index
    %176 = vector.load %arg11[%175, %c0_80, %c0_81] : memref<2x8x128xf32, #tpu.memory_space<vmem>>, vector<1x8x128xf32>
    %177 = vector.shape_cast %176 : vector<1x8x128xf32> to vector<8x128xf32>
    %178 = arith.addf %177, %162 : vector<8x128xf32>
    %179 = arith.addf %178, %174 : vector<8x128xf32>
    %cst_82 = arith.constant dense<0.000000e+00> : vector<8xf32>
    %180 = vector.multi_reduction <add>, %179, %cst_82 [1] : vector<8x128xf32> to vector<8xf32>
    %181 = vector.shape_cast %180 : vector<8xf32> to vector<8x1xf32>
    %cst_83 = arith.constant 1.280000e+02 : f32
    %182 = vector.broadcast %cst_83 : f32 to vector<8x1xf32>
    %183 = arith.divf %181, %182 : vector<8x1xf32>
    %184 = vector.broadcast %183 : vector<8x1xf32> to vector<8x128xf32>
    %185 = arith.subf %179, %184 : vector<8x128xf32>
    %186 = arith.mulf %185, %185 : vector<8x128xf32>
    %cst_84 = arith.constant dense<0.000000e+00> : vector<8xf32>
    %187 = vector.multi_reduction <add>, %186, %cst_84 [1] : vector<8x128xf32> to vector<8xf32>
    %188 = vector.shape_cast %187 : vector<8xf32> to vector<8x1xf32>
    %cst_85 = arith.constant 1.280000e+02 : f32
    %189 = vector.broadcast %cst_85 : f32 to vector<8x1xf32>
    %190 = arith.divf %188, %189 : vector<8x1xf32>
    %cst_86 = arith.constant 9.99999996E-13 : f32
    %191 = vector.broadcast %cst_86 : f32 to vector<8x1xf32>
    %192 = arith.addf %190, %191 : vector<8x1xf32>
    %193 = math.rsqrt %192 : vector<8x1xf32>
    %194 = vector.broadcast %193 : vector<8x1xf32> to vector<8x128xf32>
    %195 = arith.mulf %185, %194 : vector<8x128xf32>
    %c0_87 = arith.constant 0 : index
    %c0_88 = arith.constant 0 : index
    %196 = vector.load %arg7[%c0_87, %c0_88] : memref<1x128xf32, #tpu.memory_space<vmem>>, vector<1x128xf32>
    %197 = vector.broadcast %196 : vector<1x128xf32> to vector<8x128xf32>
    %198 = arith.mulf %197, %195 : vector<8x128xf32>
    %c0_89 = arith.constant 0 : index
    %c0_90 = arith.constant 0 : index
    %199 = vector.load %arg8[%c0_89, %c0_90] : memref<1x128xf32, #tpu.memory_space<vmem>>, vector<1x128xf32>
    %200 = vector.broadcast %199 : vector<1x128xf32> to vector<8x128xf32>
    %201 = arith.addf %198, %200 : vector<8x128xf32>
    %c0_91 = arith.constant 0 : index
    %c0_92 = arith.constant 0 : index
    %202 = vector.load %arg10[%c0_91, %c0_92] : memref<8x128xf32, #tpu.memory_space<vmem>>, vector<8x128xf32>
    tpu.vector_store %arg10[%c0_91, %c0_92], %201 {strides = array<i32>} : memref<8x128xf32, #tpu.memory_space<vmem>>, vector<8x128xf32>,
    return
  }
  func.func @transform_0(%arg0: i32, %arg1: i32, %arg2: memref<32xi32, #tpu.memory_space<smem>>) -> (i32, i32) {
    %c2_i32 = arith.constant 2 : i32
    %0 = arith.muli %arg0, %c2_i32 : i32
    %1 = arith.addi %0, %arg1 : i32
    %c0_i32 = arith.constant 0 : i32
    %c0_i32_0 = arith.constant 0 : i32
    return %1, %c0_i32 : i32, i32
  }
  func.func @transform_1(%arg0: i32, %arg1: i32, %arg2: memref<32xi32, #tpu.memory_space<smem>>) -> (i32, i32) {
    %c2_i32 = arith.constant 2 : i32
    %0 = arith.muli %arg0, %c2_i32 : i32
    %1 = arith.addi %0, %arg1 : i32
    %c0_i32 = arith.constant 0 : i32
    %c0_i32_0 = arith.constant 0 : i32
    return %1, %c0_i32 : i32, i32
  }
  func.func @transform_2(%arg0: i32, %arg1: i32, %arg2: memref<32xi32, #tpu.memory_space<smem>>) -> (i32, i32) {
    %c0_i32 = arith.constant 0 : i32
    %c0_i32_0 = arith.constant 0 : i32
    %c0_i32_1 = arith.constant 0 : i32
    return %c0_i32, %c0_i32_0 : i32, i32
  }
  func.func @transform_3(%arg0: i32, %arg1: i32, %arg2: memref<32xi32, #tpu.memory_space<smem>>) -> (i32, i32) {
    %c0_i32 = arith.constant 0 : i32
    %c0_i32_0 = arith.constant 0 : i32
    %c0_i32_1 = arith.constant 0 : i32
    return %c0_i32, %c0_i32_0 : i32, i32
  }
  func.func @transform_4(%arg0: i32, %arg1: i32, %arg2: memref<32xi32, #tpu.memory_space<smem>>) -> (i32, i32) {
    %c0_i32 = arith.constant 0 : i32
    %c0_i32_0 = arith.constant 0 : i32
    %c0_i32_1 = arith.constant 0 : i32
    return %c0_i32, %c0_i32_0 : i32, i32
  }
  func.func @transform_5(%arg0: i32, %arg1: i32, %arg2: memref<32xi32, #tpu.memory_space<smem>>) -> (i32, i32) {
    %c0_i32 = arith.constant 0 : i32
    %c0_i32_0 = arith.constant 0 : i32
    %c0_i32_1 = arith.constant 0 : i32
    return %c0_i32, %c0_i32_0 : i32, i32
  }
  func.func @transform_7(%arg0: i32, %arg1: i32, %arg2: memref<32xi32, #tpu.memory_space<smem>>) -> (i32, i32) {
    %c2_i32 = arith.constant 2 : i32
    %0 = arith.muli %arg0, %c2_i32 : i32
    %1 = arith.addi %0, %arg1 : i32
    %c0_i32 = arith.constant 0 : i32
    %c0_i32_0 = arith.constant 0 : i32
    return %1, %c0_i32 : i32, i32
  }
}

</mosaic_0001>

<llo_original>
// kernel: tpu_custom_call.1
$region0: #{tpu_custom_call.1}
  #allocation0 [shape = 'u32[]', space=smem, size = 0x4, offset = 0x4, fixed_abs, tag = 'smem constant byte address 0x4 - core index']
  #allocation1 [shape = 'u32[144,128]{1,0:T(1,128)}', space=vmem, size = 0x12000, scoped, tag = 'internal scratch']
  #allocation2 [shape = 'f32[2,8,128]{2,1,0:T(8,128)}', space=vmem, size = 0x2000, scoped, tag = 'scratch operand']
  #allocation3 [shape = 's32[32]{0}', space=sflag, size = 0x80, scoped, tag = 'scratch operand']
  #allocation4 [shape = 's32[1]{0}', space=sflag, size = 0x4, scoped, tag = 'scoped memory for tpu_custom_call.1']
  #allocation5 [shape = 'u8[512]{0}', space=smem, size = 0x200, scoped, tag = 'prefetched SMEM operand 0']
  #allocation8 [shape = 's32[]', space=sflag, size = 0x4, offset = 0, fixed_abs, tag = 'sflag constant byte address 0x0 - dummy sync flag']
  #allocation9 [shape = 's32[]', space=sflag, size = 0x4, offset = 0, fixed_abs, tag = 'sflag constant byte address 0x0 - dummy sync flag']
  #allocation10 [shape = 'u32[]', space=smem, size = 0x4, offset = 0x44, fixed_abs, tag = 'smem constant byte address 0x44 - assertion arg 0']
  #allocation11 [shape = 'u32[]', space=smem, size = 0x4, offset = 0x48, fixed_abs, tag = 'smem constant byte address 0x48 - assertion arg 1']
  #allocation12 [shape = 's32[]', space=sflag, size = 0x4, offset = 0, fixed_abs, tag = 'sflag constant byte address 0x0 - dummy sync flag']
  #allocation13 [shape = 's32[]', space=sflag, size = 0x4, offset = 0, fixed_abs, tag = 'sflag constant byte address 0x0 - dummy sync flag']
  #allocation14 [shape = 's32[]', space=sflag, size = 0x4, offset = 0, fixed_abs, tag = 'sflag constant byte address 0x0 - dummy sync flag']
  #allocation15 [shape = 's32[]', space=sflag, size = 0x4, offset = 0, fixed_abs, tag = 'sflag constant byte address 0x0 - dummy sync flag']
  #allocation16 [shape = 's32[]', space=sflag, size = 0x4, offset = 0, fixed_abs, tag = 'sflag constant byte address 0x0 - dummy sync flag']
  #allocation17 [shape = 's32[]', space=sflag, size = 0x4, offset = 0, fixed_abs, tag = 'sflag constant byte address 0x0 - dummy sync flag']
  #allocation18 [shape = 's32[]', space=sflag, size = 0x4, offset = 0, fixed_abs, tag = 'sflag constant byte address 0x0 - dummy sync flag']
  #allocation19 [shape = 's32[]', space=sflag, size = 0x4, offset = 0, fixed_abs, tag = 'sflag constant byte address 0x0 - dummy sync flag']
  #allocation20 [shape = 's32[]', space=sflag, size = 0x4, offset = 0, fixed_abs, tag = 'sflag constant byte address 0x0 - dummy sync flag']
  #allocation21 [shape = 's32[]', space=sflag, size = 0x4, offset = 0, fixed_abs, tag = 'sflag constant byte address 0x0 - dummy sync flag']
  #allocation22 [shape = 's32[]', space=sflag, size = 0x4, offset = 0, fixed_abs, tag = 'sflag constant byte address 0x0 - dummy sync flag']
  #allocation23 [shape = 's32[]', space=sflag, size = 0x4, offset = 0, fixed_abs, tag = 'sflag constant byte address 0x0 - dummy sync flag']
  #allocation24 [shape = 's32[]', space=sflag, size = 0x4, offset = 0, fixed_abs, tag = 'sflag constant byte address 0x0 - dummy sync flag']
  #allocation25 [shape = 's32[]', space=sflag, size = 0x4, offset = 0, fixed_abs, tag = 'sflag constant byte address 0x0 - dummy sync flag']
  #allocation26 [shape = 's32[]', space=sflag, size = 0x4, offset = 0, fixed_abs, tag = 'sflag constant byte address 0x0 - dummy sync flag']
  #allocation27 [shape = 's32[]', space=sflag, size = 0x4, offset = 0, fixed_abs, tag = 'sflag constant byte address 0x0 - dummy sync flag']
  #allocation28 [shape = 's32[]', space=sflag, size = 0x4, offset = 0, fixed_abs, tag = 'sflag constant byte address 0x0 - dummy sync flag']
  #allocation29 [shape = 's32[]', space=sflag, size = 0x4, offset = 0, fixed_abs, tag = 'sflag constant byte address 0x0 - dummy sync flag']
  #allocation30 [shape = 's32[]', space=sflag, size = 0x4, offset = 0, fixed_abs, tag = 'sflag constant byte address 0x0 - dummy sync flag']
  #allocation31 [shape = 's32[]', space=sflag, size = 0x4, offset = 0, fixed_abs, tag = 'sflag constant byte address 0x0 - dummy sync flag']
  #allocation32 [shape = 's32[]', space=sflag, size = 0x4, offset = 0, fixed_abs, tag = 'sflag constant byte address 0x0 - dummy sync flag']
  #allocation33 [shape = 's32[]', space=sflag, size = 0x4, offset = 0, fixed_abs, tag = 'sflag constant byte address 0x0 - dummy sync flag']
  #allocation34 [shape = 's32[]', space=sflag, size = 0x4, offset = 0, fixed_abs, tag = 'sflag constant byte address 0x0 - dummy sync flag']
  #allocation35 [shape = 's32[]', space=sflag, size = 0x4, offset = 0, fixed_abs, tag = 'sflag constant byte address 0x0 - dummy sync flag']
  #allocation36 [shape = 's32[]', space=sflag, size = 0x4, offset = 0, fixed_abs, tag = 'sflag constant byte address 0x0 - dummy sync flag']
  #allocation37 [shape = 's32[]', space=sflag, size = 0x4, offset = 0, fixed_abs, tag = 'sflag constant byte address 0x0 - dummy sync flag']
  #allocation38 [shape = 's32[]', space=sflag, size = 0x4, offset = 0, fixed_abs, tag = 'sflag constant byte address 0x0 - dummy sync flag']
  #allocation39 [shape = 's32[]', space=sflag, size = 0x4, offset = 0, fixed_abs, tag = 'sflag constant byte address 0x0 - dummy sync flag']
  #allocation40 [shape = 's32[]', space=sflag, size = 0x4, offset = 0, fixed_abs, tag = 'sflag constant byte address 0x0 - dummy sync flag']
  #allocation41 [shape = 's32[]', space=sflag, size = 0x4, offset = 0, fixed_abs, tag = 'sflag constant byte address 0x0 - dummy sync flag']
  %s0 = inlined_call_operand.vmem [shape: s32[32], index: 0, kind: input, shape index: {}]
  %s1 = inlined_call_operand.vmem [shape: s32[32,1], index: 1, kind: input, shape index: {}]
  %s2 = inlined_call_operand.vmem [shape: s32[32,1], index: 2, kind: input, shape index: {}]
  %s3 = inlined_call_operand.vmem [shape: f32[32,128], index: 3, kind: input, shape index: {}]
  %s4 = inlined_call_operand.vmem [shape: f32[8,128], index: 4, kind: input, shape index: {}]
  %s5 = inlined_call_operand.vmem [shape: f32[1,128], index: 5, kind: input, shape index: {}]
  %s6 = inlined_call_operand.vmem [shape: f32[1,128], index: 6, kind: input, shape index: {}]
  %s7 = inlined_call_operand.hbm [shape: f32[100,128], index: 7, kind: input, shape index: {}]
  %s8 = inlined_call_operand.hbm [shape: f32[32,128], index: 8, kind: output, shape index: {}]
  %s9 = sld [smem:[#allocation0]]
  $region129: #{tpu_custom_call.1} parent=0
    _
  %s11 = ssub.s32 1, %s9
  %s12 = scalar_select 0, %s11, %s9
  %s13 = sshll.u32 %s0, 4
  %s14 = int_to_ptr.vmem [resolvable:$true] %s13
  %16 = dma.vmem_to_smem %s14, 16, [#allocation5], [#allocation4]
  %17 = dma.done [#allocation4], 16
  %18 = sfence
  $region1: #{tpu_custom_call.1} parent=0
    #allocation6 [shape = 'u8[8192]{0}', space=vmem, size = 0x2000, scoped, tag = 'output window, operand 0']
    #allocation7 [shape = 's32[2]{0}', space=sflag, size = 0x8, scoped, tag = 'scoped memory for tpu_custom_call.1']
    %19 = vsyncpa [#allocation7], 0
    %s20 = scalar_lea.sflag [#allocation7], 1
    %21 = vsyncpa %s20, 0
    loop: start=0, step=1, limit=6
    $region2: #{tpu_custom_call.1} parent=1 // loop_pre_header
      _
    $region3: #{tpu_custom_call.1} parent=1 // loop_header
      %s23 = sphi 0, %s27
      %p24 = scmp.ge.s32.totalorder %s23, 6
      %s30 = sphi 0, %s42
      %s31 = sphi 0, %s38
      %s32 = sphi 0, %s30
      %s33 = sphi 0, %s31
      %s34 = sphi 0, %s32
      %s35 = sphi 0, %s33
      %s49 = sphi 0, %s51
      %s52 = sphi 0, %s49
      %s53 = sphi 0, %s52
      %s69 = sphi 0, %s53
      %s79 = sphi 0, %s81
      %s82 = sphi 0, %s79
      %s83 = sphi 0, %s82
      %s99 = sphi 0, %s83
      %s103 = sphi 0, %s103
      %s105 = sphi 0, %s103
      %s106 = sphi 0, %s105
      %s120 = sphi 0, %s106
      %s124 = sphi 0, %s124
      %s126 = sphi 0, %s124
      %s127 = sphi 0, %s126
      %s141 = sphi 0, %s127
      %s145 = sphi 0, %s145
      %s147 = sphi 0, %s145
      %s148 = sphi 0, %s147
      %s162 = sphi 0, %s148
      %s166 = sphi 0, %s166
      %s168 = sphi 0, %s166
      %s169 = sphi 0, %s168
      %s183 = sphi 0, %s169
      %s193 = sphi 0, %s195
      %s196 = sphi 0, %s193
      %s197 = sphi 0, %s196
      %s213 = sphi 0, %s197
    $region4: #{tpu_custom_call.1} parent=1 // loop_header_branch
      %26 = sbr.rel (%p24) target = $region8
    $region5: #{tpu_custom_call.1} parent=1 // loop_body
      %s28 = ssub.s32 %s23, 1
      %s29 = ssub.s32 %s23, 2
      %s36 = sadd.s32 1, %s31
      %p37 = scmp.ge.s32.totalorder %s36, 2
      %s38 = scalar_select %p37, 0, %s36
      %s39 = sadd.s32 1, %s30
      %s40 = scalar_select %p37, %s39, %s30
      %p41 = scmp.ge.s32.totalorder %s40, 2
      %s42 = scalar_select %p41, 0, %s40
      %s43 = smul.u32 %s30, 2
      %s44 = sadd.s32 %s43, %s31
      %s45 = smul.u32 %s42, 2
      %s46 = sadd.s32 %s45, %s38
      %s47 = ssub.s32 %s44, %s46
      %p48 = scmp.eq.s32.totalorder %s47, 0
      %s50 = sadd.s32 %s49, 1
      %s51 = scalar_select %p48, %s49, %s50
      %p54 = pneg %p48
      %p55 = scmp.eq.s32.totalorder %s23, 3
      %p56 = por %p54, %p55
      %p57 = scmp.ne.s32.totalorder %s49, %s52
      %p58 = scmp.eq.s32.totalorder %s23, 0
      %p59 = por %p57, %p58
      %p60 = scmp.ne.s32.totalorder %s49, %s52
      %p61 = scmp.eq.s32.totalorder %s28, 3
      %p62 = por %p60, %p61
      %p63 = scmp.ne.s32.totalorder %s52, %s53
      %p64 = scmp.eq.s32.totalorder %s28, 0
      %p65 = por %p63, %p64
      %p66 = scmp.ne.s32.totalorder %s52, %s53
      %p67 = scmp.eq.s32.totalorder %s29, 3
      %p68 = por %p66, %p67
      %p70 = scmp.ne.s32.totalorder %s53, %s69
      %p71 = scmp.eq.s32.totalorder %s29, 0
      %p72 = por %p70, %p71
      %s73 = smul.u32 %s30, 2
      %s74 = sadd.s32 %s73, %s31
      %s75 = smul.u32 %s42, 2
      %s76 = sadd.s32 %s75, %s38
      %s77 = ssub.s32 %s74, %s76
      %p78 = scmp.eq.s32.totalorder %s77, 0
      %s80 = sadd.s32 %s79, 1
      %s81 = scalar_select %p78, %s79, %s80
      %p84 = pneg %p78
      %p85 = scmp.eq.s32.totalorder %s23, 3
      %p86 = por %p84, %p85
      %p87 = scmp.ne.s32.totalorder %s79, %s82
      %p88 = scmp.eq.s32.totalorder %s23, 0
      %p89 = por %p87, %p88
      %p90 = scmp.ne.s32.totalorder %s79, %s82
      %p91 = scmp.eq.s32.totalorder %s28, 3
      %p92 = por %p90, %p91
      %p93 = scmp.ne.s32.totalorder %s82, %s83
      %p94 = scmp.eq.s32.totalorder %s28, 0
      %p95 = por %p93, %p94
      %p96 = scmp.ne.s32.totalorder %s82, %s83
      %p97 = scmp.eq.s32.totalorder %s29, 3
      %p98 = por %p96, %p97
      %p100 = scmp.ne.s32.totalorder %s83, %s99
      %p101 = scmp.eq.s32.totalorder %s29, 0
      %p102 = por %p100, %p101
      %s104 = sadd.s32 %s103, 1
      %p107 = scmp.eq.s32.totalorder %s23, 3
      %p108 = scmp.ne.s32.totalorder %s103, %s105
      %p109 = scmp.eq.s32.totalorder %s23, 0
      %p110 = por %p108, %p109
      %p111 = scmp.ne.s32.totalorder %s103, %s105
      %p112 = scmp.eq.s32.totalorder %s28, 3
      %p113 = por %p111, %p112
      %p114 = scmp.ne.s32.totalorder %s105, %s106
      %p115 = scmp.eq.s32.totalorder %s28, 0
      %p116 = por %p114, %p115
      %p117 = scmp.ne.s32.totalorder %s105, %s106
      %p118 = scmp.eq.s32.totalorder %s29, 3
      %p119 = por %p117, %p118
      %p121 = scmp.ne.s32.totalorder %s106, %s120
      %p122 = scmp.eq.s32.totalorder %s29, 0
      %p123 = por %p121, %p122
      %s125 = sadd.s32 %s124, 1
      %p128 = scmp.eq.s32.totalorder %s23, 3
      %p129 = scmp.ne.s32.totalorder %s124, %s126
      %p130 = scmp.eq.s32.totalorder %s23, 0
      %p131 = por %p129, %p130
      %p132 = scmp.ne.s32.totalorder %s124, %s126
      %p133 = scmp.eq.s32.totalorder %s28, 3
      %p134 = por %p132, %p133
      %p135 = scmp.ne.s32.totalorder %s126, %s127
      %p136 = scmp.eq.s32.totalorder %s28, 0
      %p137 = por %p135, %p136
      %p138 = scmp.ne.s32.totalorder %s126, %s127
      %p139 = scmp.eq.s32.totalorder %s29, 3
      %p140 = por %p138, %p139
      %p142 = scmp.ne.s32.totalorder %s127, %s141
      %p143 = scmp.eq.s32.totalorder %s29, 0
      %p144 = por %p142, %p143
      %s146 = sadd.s32 %s145, 1
      %p149 = scmp.eq.s32.totalorder %s23, 3
      %p150 = scmp.ne.s32.totalorder %s145, %s147
      %p151 = scmp.eq.s32.totalorder %s23, 0
      %p152 = por %p150, %p151
      %p153 = scmp.ne.s32.totalorder %s145, %s147
      %p154 = scmp.eq.s32.totalorder %s28, 3
      %p155 = por %p153, %p154
      %p156 = scmp.ne.s32.totalorder %s147, %s148
      %p157 = scmp.eq.s32.totalorder %s28, 0
      %p158 = por %p156, %p157
      %p159 = scmp.ne.s32.totalorder %s147, %s148
      %p160 = scmp.eq.s32.totalorder %s29, 3
      %p161 = por %p159, %p160
      %p163 = scmp.ne.s32.totalorder %s148, %s162
      %p164 = scmp.eq.s32.totalorder %s29, 0
      %p165 = por %p163, %p164
      %s167 = sadd.s32 %s166, 1
      %p170 = scmp.eq.s32.totalorder %s23, 3
      %p171 = scmp.ne.s32.totalorder %s166, %s168
      %p172 = scmp.eq.s32.totalorder %s23, 0
      %p173 = por %p171, %p172
      %p174 = scmp.ne.s32.totalorder %s166, %s168
      %p175 = scmp.eq.s32.totalorder %s28, 3
      %p176 = por %p174, %p175
      %p177 = scmp.ne.s32.totalorder %s168, %s169
      %p178 = scmp.eq.s32.totalorder %s28, 0
      %p179 = por %p177, %p178
      %p180 = scmp.ne.s32.totalorder %s168, %s169
      %p181 = scmp.eq.s32.totalorder %s29, 3
      %p182 = por %p180, %p181
      %p184 = scmp.ne.s32.totalorder %s169, %s183
      %p185 = scmp.eq.s32.totalorder %s29, 0
      %p186 = por %p184, %p185
      %s187 = smul.u32 %s30, 2
      %s188 = sadd.s32 %s187, %s31
      %s189 = smul.u32 %s42, 2
      %s190 = sadd.s32 %s189, %s38
      %s191 = ssub.s32 %s188, %s190
      %p192 = scmp.eq.s32.totalorder %s191, 0
      %s194 = sadd.s32 %s193, 1
      %s195 = scalar_select %p192, %s193, %s194
      %p198 = pneg %p192
      %p199 = scmp.eq.s32.totalorder %s23, 3
      %p200 = por %p198, %p199
      %p201 = scmp.ne.s32.totalorder %s193, %s196
      %p202 = scmp.eq.s32.totalorder %s23, 0
      %p203 = por %p201, %p202
      %p204 = scmp.ne.s32.totalorder %s193, %s196
      %p205 = scmp.eq.s32.totalorder %s28, 3
      %p206 = por %p204, %p205
      %p207 = scmp.ne.s32.totalorder %s196, %s197
      %p208 = scmp.eq.s32.totalorder %s28, 0
      %p209 = por %p207, %p208
      %p210 = scmp.ne.s32.totalorder %s196, %s197
      %p211 = scmp.eq.s32.totalorder %s29, 3
      %p212 = por %p210, %p211
      %p214 = scmp.ne.s32.totalorder %s197, %s213
      %p215 = scmp.eq.s32.totalorder %s29, 0
      %p216 = por %p214, %p215
      %p217 = scmp.le.s32.totalorder 1, %s23
      %p218 = scmp.lt.s32.totalorder %s23, 5
      %p219 = pnand %p217, %p218
      %p220 = pneg %p219
      // Predicated region
      $region9: #{tpu_custom_call.1} parent=5 // pred_check
        _
      $region10: #{tpu_custom_call.1} parent=5 // pred_check_branch
        %222 = sbr.rel (%p219) target = $region12
      $region11: #{tpu_custom_call.1} parent=5 // pred_region
        %s223 = ssub.s32 %s23, 1
        // Predicated region
        $region13: #{tpu_custom_call.1} parent=11 // pred_check
          %p224 = pneg %p116
        $region14: #{tpu_custom_call.1} parent=11 // pred_check_branch
          %226 = sbr.rel (%p224) target = $region16
        $region15: #{tpu_custom_call.1} parent=11 // pred_region
          _
        $region16: #{tpu_custom_call.1} parent=11 // pred_fallthru
          _
        // Predicated region
        $region17: #{tpu_custom_call.1} parent=11 // pred_check
          %p227 = pneg %p137
        $region18: #{tpu_custom_call.1} parent=11 // pred_check_branch
          %229 = sbr.rel (%p227) target = $region20
        $region19: #{tpu_custom_call.1} parent=11 // pred_region
          _
        $region20: #{tpu_custom_call.1} parent=11 // pred_fallthru
          _
        // Predicated region
        $region21: #{tpu_custom_call.1} parent=11 // pred_check
          %p230 = pneg %p158
        $region22: #{tpu_custom_call.1} parent=11 // pred_check_branch
          %232 = sbr.rel (%p230) target = $region24
        $region23: #{tpu_custom_call.1} parent=11 // pred_region
          _
        $region24: #{tpu_custom_call.1} parent=11 // pred_fallthru
          _
        // Predicated region
        $region25: #{tpu_custom_call.1} parent=11 // pred_check
          %p233 = pneg %p179
        $region26: #{tpu_custom_call.1} parent=11 // pred_check_branch
          %235 = sbr.rel (%p233) target = $region28
        $region27: #{tpu_custom_call.1} parent=11 // pred_region
          _
        $region28: #{tpu_custom_call.1} parent=11 // pred_fallthru
          _
      $region12: #{tpu_custom_call.1} parent=5 // pred_fallthru
        _
      %p236 = scmp.lt.s32.totalorder %s23, 4
      // Predicated region
      $region29: #{tpu_custom_call.1} parent=5 // pred_check
        %p237 = pneg %p236
      $region30: #{tpu_custom_call.1} parent=5 // pred_check_branch
        %239 = sbr.rel (%p237) target = $region32
      $region31: #{tpu_custom_call.1} parent=5 // pred_region
        // Predicated region
        $region33: #{tpu_custom_call.1} parent=31 // pred_check
          %p240 = pneg %p59
        $region34: #{tpu_custom_call.1} parent=31 // pred_check_branch
          %242 = sbr.rel (%p240) target = $region36
        $region35: #{tpu_custom_call.1} parent=31 // pred_region
          %s243 = smul.u32 %s30, 2
          %s244 = sadd.s32 %s243, %s31
          %p245 = scmp.lt.s32.totalorder %s244, 3
          %s246 = scalar_select %p245, %s244, 3
          %s247 = smul.addr %s246, 8
          %s248 = scalar_lea.vmem %s1, %s247
          %s249 = smul.u32 %s30, 2
          %s250 = sadd.s32 %s249, %s31
        $region36: #{tpu_custom_call.1} parent=31 // pred_fallthru
          _
        // Predicated region
        $region37: #{tpu_custom_call.1} parent=31 // pred_check
          %p251 = pneg %p89
        $region38: #{tpu_custom_call.1} parent=31 // pred_check_branch
          %253 = sbr.rel (%p251) target = $region40
        $region39: #{tpu_custom_call.1} parent=31 // pred_region
          %s254 = smul.u32 %s30, 2
          %s255 = sadd.s32 %s254, %s31
          %p256 = scmp.lt.s32.totalorder %s255, 3
          %s257 = scalar_select %p256, %s255, 3
          %s258 = smul.addr %s257, 8
          %s259 = scalar_lea.vmem %s2, %s258
          %s260 = smul.u32 %s30, 2
          %s261 = sadd.s32 %s260, %s31
        $region40: #{tpu_custom_call.1} parent=31 // pred_fallthru
          _
      $region32: #{tpu_custom_call.1} parent=5 // pred_fallthru
        _
      %p262 = scmp.le.s32.totalorder 1, %s23
      %p263 = scmp.lt.s32.totalorder %s23, 5
      %p264 = pnand %p262, %p263
      %p265 = pneg %p264
      // Predicated region
      $region41: #{tpu_custom_call.1} parent=5 // pred_check
        _
      $region42: #{tpu_custom_call.1} parent=5 // pred_check_branch
        %267 = sbr.rel (%p264) target = $region44
      $region43: #{tpu_custom_call.1} parent=5 // pred_region
        %s268 = ssub.s32 %s23, 1
        %s269 = smul.u32 %s32, 2
        %s270 = sadd.s32 %s269, %s33
        %p271 = scmp.lt.s32.totalorder %s270, 3
        %s272 = scalar_select %p271, %s270, 3
        %s273 = smul.addr %s272, 8
        %s274 = scalar_lea.vmem %s1, %s273
        %p275 = pneg %p65
        %p276 = pneg %p62
        %s277 = smul.u32 %s32, 2
        %s278 = sadd.s32 %s277, %s33
        %p279 = scmp.lt.s32.totalorder %s278, 3
        %s280 = scalar_select %p279, %s278, 3
        %s281 = smul.addr %s280, 8
        %s282 = scalar_lea.vmem %s2, %s281
        %p283 = pneg %p95
        %p284 = pneg %p92
        %p285 = pneg %p116
        %p286 = pneg %p113
        %p287 = pneg %p137
        %p288 = pneg %p134
        %p289 = pneg %p158
        %p290 = pneg %p155
        %p291 = pneg %p179
        %p292 = pneg %p176
        %p293 = pneg %p209
        %p294 = pneg %p206
        %s295 = sand.u32 %s196, 1
        %s296 = scalar_lea.sflag [#allocation7], %s295
        %s297 = sand.u32 %s196, 1
        %s298 = smul.addr %s297, 8
        %s299 = scalar_lea.vmem [#allocation6], %s298
        %s300 = smul.u32 %s32, 2
        %s301 = sadd.s32 %s300, %s33
        %p302 = scmp.lt.s32.totalorder %s301, 3
        %s303 = scalar_select %p302, %s301, 3
        %s304 = smul.addr %s303, 8
        %s305 = scalar_lea.vmem %s1, %s304
        %s306 = smul.u32 %s32, 2
        %s307 = sadd.s32 %s306, %s33
        %s308 = smul.u32 %s32, 2
        %s309 = sadd.s32 %s308, %s33
        %p310 = scmp.lt.s32.totalorder %s309, 3
        %s311 = scalar_select %p310, %s309, 3
        %s312 = smul.addr %s311, 8
        %s313 = scalar_lea.vmem %s2, %s312
        %s314 = smul.u32 %s32, 2
        %s315 = sadd.s32 %s314, %s33
        %s316 = smul.u32 %s32, 2
        %s317 = sadd.s32 %s316, %s33
        %s318 = smul.u32 %s32, 2
        %s319 = sadd.s32 %s318, %s33
        %s320 = sand.u32 %s33, 1
        %p321 = scmp.eq.s32.totalorder %s33, 0
        // Predicated region
        $region45: #{tpu_custom_call.1} parent=43 // pred_check
          %p322 = pneg %p321
        $region46: #{tpu_custom_call.1} parent=43 // pred_check_branch
          %324 = sbr.rel (%p322) target = $region48
        $region47: #{tpu_custom_call.1} parent=43 // pred_region
          %s325 = smul.u32 %s319, 8
          %s326 = sld [smem:[#allocation5 + %s325]]
          %s327 = smul.addr %s326, 16
          %s328 = scalar_lea.hbm %s7, %s327
          %s329 = smul.u32 %s320, 8
          %s330 = scalar_lea.vmem [#allocation2], %s329
          %s331 = smul.u32 %s320, 16
          %s332 = scalar_lea.sflag [#allocation3], %s331
          // Predicated region
          $region49: #{tpu_custom_call.1} parent=47 // pred_check
            _
          $region50: #{tpu_custom_call.1} parent=47 // pred_check_branch
            %334 = sbr.rel target = $region52
          $region51: #{tpu_custom_call.1} parent=47 // pred_region
            %335 = sst [smem:[#allocation10]] [#allocation9]
            %336 = sst [smem:[#allocation11]] [#allocation8]
          $region52: #{tpu_custom_call.1} parent=47 // pred_fallthru
            _
          %338 = shalt.err (0)
          %s340 = sshll.u32 %s330, 4
          %s341 = int_to_ptr.vmem [resolvable:$true] %s340
          %343 = dma.hbm_to_vmem [thread:$0]  %s328, 16, %s341, %s332
          %s344 = sadd.s32 %s325, 1
          %s345 = sld [smem:[#allocation5 + %s344]]
          %s346 = smul.addr %s345, 16
          %s347 = scalar_lea.hbm %s7, %s346
          %s348 = sadd.s32 1, %s329
          %s349 = scalar_lea.vmem [#allocation2], %s348
          %s350 = sadd.s32 1, %s331
          %s351 = scalar_lea.sflag [#allocation3], %s350
          // Predicated region
          $region53: #{tpu_custom_call.1} parent=47 // pred_check
            _
          $region54: #{tpu_custom_call.1} parent=47 // pred_check_branch
            %353 = sbr.rel target = $region56
          $region55: #{tpu_custom_call.1} parent=47 // pred_region
            %354 = sst [smem:[#allocation10]] [#allocation13]
            %355 = sst [smem:[#allocation11]] [#allocation12]
          $region56: #{tpu_custom_call.1} parent=47 // pred_fallthru
            _
          %357 = shalt.err (0)
          %s359 = sshll.u32 %s349, 4
          %s360 = int_to_ptr.vmem [resolvable:$true] %s359
          %362 = dma.hbm_to_vmem [thread:$0]  %s347, 16, %s360, %s351
          %s363 = sadd.s32 %s325, 2
          %s364 = sld [smem:[#allocation5 + %s363]]
          %s365 = smul.addr %s364, 16
          %s366 = scalar_lea.hbm %s7, %s365
          %s367 = sadd.s32 2, %s329
          %s368 = scalar_lea.vmem [#allocation2], %s367
          %s369 = sadd.s32 2, %s331
          %s370 = scalar_lea.sflag [#allocation3], %s369
          // Predicated region
          $region57: #{tpu_custom_call.1} parent=47 // pred_check
            _
          $region58: #{tpu_custom_call.1} parent=47 // pred_check_branch
            %372 = sbr.rel target = $region60
          $region59: #{tpu_custom_call.1} parent=47 // pred_region
            %373 = sst [smem:[#allocation10]] [#allocation15]
            %374 = sst [smem:[#allocation11]] [#allocation14]
          $region60: #{tpu_custom_call.1} parent=47 // pred_fallthru
            _
          %376 = shalt.err (0)
          %s378 = sshll.u32 %s368, 4
          %s379 = int_to_ptr.vmem [resolvable:$true] %s378
          %381 = dma.hbm_to_vmem [thread:$0]  %s366, 16, %s379, %s370
          %s382 = sadd.s32 %s325, 3
          %s383 = sld [smem:[#allocation5 + %s382]]
          %s384 = smul.addr %s383, 16
          %s385 = scalar_lea.hbm %s7, %s384
          %s386 = sadd.s32 3, %s329
          %s387 = scalar_lea.vmem [#allocation2], %s386
          %s388 = sadd.s32 3, %s331
          %s389 = scalar_lea.sflag [#allocation3], %s388
          // Predicated region
          $region61: #{tpu_custom_call.1} parent=47 // pred_check
            _
          $region62: #{tpu_custom_call.1} parent=47 // pred_check_branch
            %391 = sbr.rel target = $region64
          $region63: #{tpu_custom_call.1} parent=47 // pred_region
            %392 = sst [smem:[#allocation10]] [#allocation17]
            %393 = sst [smem:[#allocation11]] [#allocation16]
          $region64: #{tpu_custom_call.1} parent=47 // pred_fallthru
            _
          %395 = shalt.err (0)
          %s397 = sshll.u32 %s387, 4
          %s398 = int_to_ptr.vmem [resolvable:$true] %s397
          %400 = dma.hbm_to_vmem [thread:$0]  %s385, 16, %s398, %s389
          %s401 = sadd.s32 %s325, 4
          %s402 = sld [smem:[#allocation5 + %s401]]
          %s403 = smul.addr %s402, 16
          %s404 = scalar_lea.hbm %s7, %s403
          %s405 = sadd.s32 4, %s329
          %s406 = scalar_lea.vmem [#allocation2], %s405
          %s407 = sadd.s32 4, %s331
          %s408 = scalar_lea.sflag [#allocation3], %s407
          // Predicated region
          $region65: #{tpu_custom_call.1} parent=47 // pred_check
            _
          $region66: #{tpu_custom_call.1} parent=47 // pred_check_branch
            %410 = sbr.rel target = $region68
          $region67: #{tpu_custom_call.1} parent=47 // pred_region
            %411 = sst [smem:[#allocation10]] [#allocation19]
            %412 = sst [smem:[#allocation11]] [#allocation18]
          $region68: #{tpu_custom_call.1} parent=47 // pred_fallthru
            _
          %414 = shalt.err (0)
          %s416 = sshll.u32 %s406, 4
          %s417 = int_to_ptr.vmem [resolvable:$true] %s416
          %419 = dma.hbm_to_vmem [thread:$0]  %s404, 16, %s417, %s408
          %s420 = sadd.s32 %s325, 5
          %s421 = sld [smem:[#allocation5 + %s420]]
          %s422 = smul.addr %s421, 16
          %s423 = scalar_lea.hbm %s7, %s422
          %s424 = sadd.s32 5, %s329
          %s425 = scalar_lea.vmem [#allocation2], %s424
          %s426 = sadd.s32 5, %s331
          %s427 = scalar_lea.sflag [#allocation3], %s426
          // Predicated region
          $region69: #{tpu_custom_call.1} parent=47 // pred_check
            _
          $region70: #{tpu_custom_call.1} parent=47 // pred_check_branch
            %429 = sbr.rel target = $region72
          $region71: #{tpu_custom_call.1} parent=47 // pred_region
            %430 = sst [smem:[#allocation10]] [#allocation21]
            %431 = sst [smem:[#allocation11]] [#allocation20]
          $region72: #{tpu_custom_call.1} parent=47 // pred_fallthru
            _
          %433 = shalt.err (0)
          %s435 = sshll.u32 %s425, 4
          %s436 = int_to_ptr.vmem [resolvable:$true] %s435
          %438 = dma.hbm_to_vmem [thread:$0]  %s423, 16, %s436, %s427
          %s439 = sadd.s32 %s325, 6
          %s440 = sld [smem:[#allocation5 + %s439]]
          %s441 = smul.addr %s440, 16
          %s442 = scalar_lea.hbm %s7, %s441
          %s443 = sadd.s32 6, %s329
          %s444 = scalar_lea.vmem [#allocation2], %s443
          %s445 = sadd.s32 6, %s331
          %s446 = scalar_lea.sflag [#allocation3], %s445
          // Predicated region
          $region73: #{tpu_custom_call.1} parent=47 // pred_check
            _
          $region74: #{tpu_custom_call.1} parent=47 // pred_check_branch
            %448 = sbr.rel target = $region76
          $region75: #{tpu_custom_call.1} parent=47 // pred_region
            %449 = sst [smem:[#allocation10]] [#allocation23]
            %450 = sst [smem:[#allocation11]] [#allocation22]
          $region76: #{tpu_custom_call.1} parent=47 // pred_fallthru
            _
          %452 = shalt.err (0)
          %s454 = sshll.u32 %s444, 4
          %s455 = int_to_ptr.vmem [resolvable:$true] %s454
          %457 = dma.hbm_to_vmem [thread:$0]  %s442, 16, %s455, %s446
          %s458 = sadd.s32 %s325, 7
          %s459 = sld [smem:[#allocation5 + %s458]]
          %s460 = smul.addr %s459, 16
          %s461 = scalar_lea.hbm %s7, %s460
          %s462 = sadd.s32 7, %s329
          %s463 = scalar_lea.vmem [#allocation2], %s462
          %s464 = sadd.s32 7, %s331
          %s465 = scalar_lea.sflag [#allocation3], %s464
          // Predicated region
          $region77: #{tpu_custom_call.1} parent=47 // pred_check
            _
          $region78: #{tpu_custom_call.1} parent=47 // pred_check_branch
            %467 = sbr.rel target = $region80
          $region79: #{tpu_custom_call.1} parent=47 // pred_region
            %468 = sst [smem:[#allocation10]] [#allocation25]
            %469 = sst [smem:[#allocation11]] [#allocation24]
          $region80: #{tpu_custom_call.1} parent=47 // pred_fallthru
            _
          %471 = shalt.err (0)
          %s473 = sshll.u32 %s463, 4
          %s474 = int_to_ptr.vmem [resolvable:$true] %s473
          %476 = dma.hbm_to_vmem [thread:$0]  %s461, 16, %s474, %s465
        $region48: #{tpu_custom_call.1} parent=43 // pred_fallthru
          _
        %s477 = sadd.s32 %s33, 1
        %p478 = scmp.lt.s32.totalorder %s477, 2
        // Predicated region
        $region81: #{tpu_custom_call.1} parent=43 // pred_check
          %p479 = pneg %p478
        $region82: #{tpu_custom_call.1} parent=43 // pred_check_branch
          %481 = sbr.rel (%p479) target = $region84
        $region83: #{tpu_custom_call.1} parent=43 // pred_region
          %s482 = sadd.s32 %s319, 1
          %s483 = ssub.s32 1, %s320
          %s484 = smul.u32 %s482, 8
          %s485 = sld [smem:[#allocation5 + %s484]]
          %s486 = smul.addr %s485, 16
          %s487 = scalar_lea.hbm %s7, %s486
          %s488 = smul.u32 %s483, 8
          %s489 = scalar_lea.vmem [#allocation2], %s488
          %s490 = smul.u32 %s483, 16
          %s491 = scalar_lea.sflag [#allocation3], %s490
          // Predicated region
          $region85: #{tpu_custom_call.1} parent=83 // pred_check
            _
          $region86: #{tpu_custom_call.1} parent=83 // pred_check_branch
            %493 = sbr.rel target = $region88
          $region87: #{tpu_custom_call.1} parent=83 // pred_region
            %494 = sst [smem:[#allocation10]] [#allocation27]
            %495 = sst [smem:[#allocation11]] [#allocation26]
          $region88: #{tpu_custom_call.1} parent=83 // pred_fallthru
            _
          %497 = shalt.err (0)
          %s499 = sshll.u32 %s489, 4
          %s500 = int_to_ptr.vmem [resolvable:$true] %s499
          %502 = dma.hbm_to_vmem [thread:$0]  %s487, 16, %s500, %s491
          %s503 = sadd.s32 %s484, 1
          %s504 = sld [smem:[#allocation5 + %s503]]
          %s505 = smul.addr %s504, 16
          %s506 = scalar_lea.hbm %s7, %s505
          %s507 = sadd.s32 1, %s488
          %s508 = scalar_lea.vmem [#allocation2], %s507
          %s509 = sadd.s32 1, %s490
          %s510 = scalar_lea.sflag [#allocation3], %s509
          // Predicated region
          $region89: #{tpu_custom_call.1} parent=83 // pred_check
            _
          $region90: #{tpu_custom_call.1} parent=83 // pred_check_branch
            %512 = sbr.rel target = $region92
          $region91: #{tpu_custom_call.1} parent=83 // pred_region
            %513 = sst [smem:[#allocation10]] [#allocation29]
            %514 = sst [smem:[#allocation11]] [#allocation28]
          $region92: #{tpu_custom_call.1} parent=83 // pred_fallthru
            _
          %516 = shalt.err (0)
          %s518 = sshll.u32 %s508, 4
          %s519 = int_to_ptr.vmem [resolvable:$true] %s518
          %521 = dma.hbm_to_vmem [thread:$0]  %s506, 16, %s519, %s510
          %s522 = sadd.s32 %s484, 2
          %s523 = sld [smem:[#allocation5 + %s522]]
          %s524 = smul.addr %s523, 16
          %s525 = scalar_lea.hbm %s7, %s524
          %s526 = sadd.s32 2, %s488
          %s527 = scalar_lea.vmem [#allocation2], %s526
          %s528 = sadd.s32 2, %s490
          %s529 = scalar_lea.sflag [#allocation3], %s528
          // Predicated region
          $region93: #{tpu_custom_call.1} parent=83 // pred_check
            _
          $region94: #{tpu_custom_call.1} parent=83 // pred_check_branch
            %531 = sbr.rel target = $region96
          $region95: #{tpu_custom_call.1} parent=83 // pred_region
            %532 = sst [smem:[#allocation10]] [#allocation31]
            %533 = sst [smem:[#allocation11]] [#allocation30]
          $region96: #{tpu_custom_call.1} parent=83 // pred_fallthru
            _
          %535 = shalt.err (0)
          %s537 = sshll.u32 %s527, 4
          %s538 = int_to_ptr.vmem [resolvable:$true] %s537
          %540 = dma.hbm_to_vmem [thread:$0]  %s525, 16, %s538, %s529
          %s541 = sadd.s32 %s484, 3
          %s542 = sld [smem:[#allocation5 + %s541]]
          %s543 = smul.addr %s542, 16
          %s544 = scalar_lea.hbm %s7, %s543
          %s545 = sadd.s32 3, %s488
          %s546 = scalar_lea.vmem [#allocation2], %s545
          %s547 = sadd.s32 3, %s490
          %s548 = scalar_lea.sflag [#allocation3], %s547
          // Predicated region
          $region97: #{tpu_custom_call.1} parent=83 // pred_check
            _
          $region98: #{tpu_custom_call.1} parent=83 // pred_check_branch
            %550 = sbr.rel target = $region100
          $region99: #{tpu_custom_call.1} parent=83 // pred_region
            %551 = sst [smem:[#allocation10]] [#allocation33]
            %552 = sst [smem:[#allocation11]] [#allocation32]
          $region100: #{tpu_custom_call.1} parent=83 // pred_fallthru
            _
          %554 = shalt.err (0)
          %s556 = sshll.u32 %s546, 4
          %s557 = int_to_ptr.vmem [resolvable:$true] %s556
          %559 = dma.hbm_to_vmem [thread:$0]  %s544, 16, %s557, %s548
          %s560 = sadd.s32 %s484, 4
          %s561 = sld [smem:[#allocation5 + %s560]]
          %s562 = smul.addr %s561, 16
          %s563 = scalar_lea.hbm %s7, %s562
          %s564 = sadd.s32 4, %s488
          %s565 = scalar_lea.vmem [#allocation2], %s564
          %s566 = sadd.s32 4, %s490
          %s567 = scalar_lea.sflag [#allocation3], %s566
          // Predicated region
          $region101: #{tpu_custom_call.1} parent=83 // pred_check
            _
          $region102: #{tpu_custom_call.1} parent=83 // pred_check_branch
            %569 = sbr.rel target = $region104
          $region103: #{tpu_custom_call.1} parent=83 // pred_region
            %570 = sst [smem:[#allocation10]] [#allocation35]
            %571 = sst [smem:[#allocation11]] [#allocation34]
          $region104: #{tpu_custom_call.1} parent=83 // pred_fallthru
            _
          %573 = shalt.err (0)
          %s575 = sshll.u32 %s565, 4
          %s576 = int_to_ptr.vmem [resolvable:$true] %s575
          %578 = dma.hbm_to_vmem [thread:$0]  %s563, 16, %s576, %s567
          %s579 = sadd.s32 %s484, 5
          %s580 = sld [smem:[#allocation5 + %s579]]
          %s581 = smul.addr %s580, 16
          %s582 = scalar_lea.hbm %s7, %s581
          %s583 = sadd.s32 5, %s488
          %s584 = scalar_lea.vmem [#allocation2], %s583
          %s585 = sadd.s32 5, %s490
          %s586 = scalar_lea.sflag [#allocation3], %s585
          // Predicated region
          $region105: #{tpu_custom_call.1} parent=83 // pred_check
            _
          $region106: #{tpu_custom_call.1} parent=83 // pred_check_branch
            %588 = sbr.rel target = $region108
          $region107: #{tpu_custom_call.1} parent=83 // pred_region
            %589 = sst [smem:[#allocation10]] [#allocation37]
            %590 = sst [smem:[#allocation11]] [#allocation36]
          $region108: #{tpu_custom_call.1} parent=83 // pred_fallthru
            _
          %592 = shalt.err (0)
          %s594 = sshll.u32 %s584, 4
          %s595 = int_to_ptr.vmem [resolvable:$true] %s594
          %597 = dma.hbm_to_vmem [thread:$0]  %s582, 16, %s595, %s586
          %s598 = sadd.s32 %s484, 6
          %s599 = sld [smem:[#allocation5 + %s598]]
          %s600 = smul.addr %s599, 16
          %s601 = scalar_lea.hbm %s7, %s600
          %s602 = sadd.s32 6, %s488
          %s603 = scalar_lea.vmem [#allocation2], %s602
          %s604 = sadd.s32 6, %s490
          %s605 = scalar_lea.sflag [#allocation3], %s604
          // Predicated region
          $region109: #{tpu_custom_call.1} parent=83 // pred_check
            _
          $region110: #{tpu_custom_call.1} parent=83 // pred_check_branch
            %607 = sbr.rel target = $region112
          $region111: #{tpu_custom_call.1} parent=83 // pred_region
            %608 = sst [smem:[#allocation10]] [#allocation39]
            %609 = sst [smem:[#allocation11]] [#allocation38]
          $region112: #{tpu_custom_call.1} parent=83 // pred_fallthru
            _
          %611 = shalt.err (0)
          %s613 = sshll.u32 %s603, 4
          %s614 = int_to_ptr.vmem [resolvable:$true] %s613
          %616 = dma.hbm_to_vmem [thread:$0]  %s601, 16, %s614, %s605
          %s617 = sadd.s32 %s484, 7
          %s618 = sld [smem:[#allocation5 + %s617]]
          %s619 = smul.addr %s618, 16
          %s620 = scalar_lea.hbm %s7, %s619
          %s621 = sadd.s32 7, %s488
          %s622 = scalar_lea.vmem [#allocation2], %s621
          %s623 = sadd.s32 7, %s490
          %s624 = scalar_lea.sflag [#allocation3], %s623
          // Predicated region
          $region113: #{tpu_custom_call.1} parent=83 // pred_check
            _
          $region114: #{tpu_custom_call.1} parent=83 // pred_check_branch
            %626 = sbr.rel target = $region116
          $region115: #{tpu_custom_call.1} parent=83 // pred_region
            %627 = sst [smem:[#allocation10]] [#allocation41]
            %628 = sst [smem:[#allocation11]] [#allocation40]
          $region116: #{tpu_custom_call.1} parent=83 // pred_fallthru
            _
          %630 = shalt.err (0)
          %s632 = sshll.u32 %s622, 4
          %s633 = int_to_ptr.vmem [resolvable:$true] %s632
          %635 = dma.hbm_to_vmem [thread:$0]  %s620, 16, %s633, %s624
        $region84: #{tpu_custom_call.1} parent=43 // pred_fallthru
          _
        %s636 = smul.u32 %s319, 8
        %s637 = sld [smem:[#allocation5 + %s636]]
        %s638 = smul.u32 %s320, 16
        %s639 = scalar_lea.sflag [#allocation3], %s638
        %s640 = smul.u32 1, 1
        %s641 = sshll.u32 %s640, 4
        %642 = dma.done %s639, %s641
        %s643 = sadd.s32 %s636, 1
        %s644 = sld [smem:[#allocation5 + %s643]]
        %s645 = sadd.s32 1, %s638
        %s646 = scalar_lea.sflag [#allocation3], %s645
        %s647 = sshll.u32 %s640, 4
        %648 = dma.done %s646, %s647
        %s649 = sadd.s32 %s636, 2
        %s650 = sld [smem:[#allocation5 + %s649]]
        %s651 = sadd.s32 2, %s638
        %s652 = scalar_lea.sflag [#allocation3], %s651
        %s653 = sshll.u32 %s640, 4
        %654 = dma.done %s652, %s653
        %s655 = sadd.s32 %s636, 3
        %s656 = sld [smem:[#allocation5 + %s655]]
        %s657 = sadd.s32 3, %s638
        %s658 = scalar_lea.sflag [#allocation3], %s657
        %s659 = sshll.u32 %s640, 4
        %660 = dma.done %s658, %s659
        %s661 = sadd.s32 %s636, 4
        %s662 = sld [smem:[#allocation5 + %s661]]
        %s663 = sadd.s32 4, %s638
        %s664 = scalar_lea.sflag [#allocation3], %s663
        %s665 = sshll.u32 %s640, 4
        %666 = dma.done %s664, %s665
        %s667 = sadd.s32 %s636, 5
        %s668 = sld [smem:[#allocation5 + %s667]]
        %s669 = sadd.s32 5, %s638
        %s670 = scalar_lea.sflag [#allocation3], %s669
        %s671 = sshll.u32 %s640, 4
        %672 = dma.done %s670, %s671
        %s673 = sadd.s32 %s636, 6
        %s674 = sld [smem:[#allocation5 + %s673]]
        %s675 = sadd.s32 6, %s638
        %s676 = scalar_lea.sflag [#allocation3], %s675
        %s677 = sshll.u32 %s640, 4
        %678 = dma.done %s676, %s677
        %s679 = sadd.s32 %s636, 7
        %s680 = sld [smem:[#allocation5 + %s679]]
        %s681 = sadd.s32 7, %s638
        %s682 = scalar_lea.sflag [#allocation3], %s681
        %s683 = sshll.u32 %s640, 4
        %684 = dma.done %s682, %s683
        %v685 = vlaneseq
        %v686 = vand.u32 %v685, 127
        %v687 = vld [vmem:[%s305] sm:$0xff]
        %688 = vset.pattern.permute.xlu0 0
        %689 = vperm.xlu0 %688, %v687
        %v690 = vpop.permute.xlu0 %689
        %vm691 = vcmp.eq.s32.totalorder %v686, %v690
        %v692 = vsel %vm691, 1, 0
        %v693 = vcvt.s32.f32 %v692
        %v694 = vld [vmem:[%s3] sm:$0xff]
        %v695 = vld [vmem:[%s3 + $0x8] sm:$0xff]
        %v696 = vld [vmem:[%s3 + $0x10] sm:$0xff]
        %v697 = vld [vmem:[%s3 + $0x18] sm:$0xff]
        %vm698 = vcmask 261120
        %v700 = vsel %vm698, %v693, 0
        %702 = vmatprep.subr.mxu0 0.0
        %703 = vmatpush1.msra.mxu0 0.0
        %704 = vmatprep.subr.mxu0 0.0
        %705 = vmatpush1.msra.mxu0 0.0
        %706 = vmatprep.subr.mxu0 0.0
        %707 = vmatpush1.msra.mxu0 0.0
        %708 = vmatprep.subr.mxu0 0.0
        %709 = vmatpush1.msra.mxu0 0.0
        %710 = vmatprep.subr.mxu0 0.0
        %711 = vmatpush1.msra.mxu0 0.0
        %712 = vmatprep.subr.mxu0 0.0
        %713 = vmatpush1.msra.mxu0 0.0
        %714 = vmatprep.subr.mxu0 0.0
        %715 = vmatpush1.msra.mxu0 0.0
        %716 = vmatprep.subr.mxu0 0.0
        %717 = vmatpush1.msra.mxu0 0.0
        %718 = vmatprep.subr.mxu0 0.0
        %719 = vmatpush1.msra.mxu0 0.0
        %720 = vmatprep.subr.mxu0 0.0
        %721 = vmatpush1.msra.mxu0 0.0
        %722 = vmatprep.subr.mxu0 0.0
        %723 = vmatpush1.msra.mxu0 0.0
        %724 = vmatprep.subr.mxu0 0.0
        %725 = vmatpush1.msra.mxu0 0.0
        %726 = vmatprep.subr.mxu0 0.0
        %727 = vmatpush1.msra.mxu0 %v697
        %728 = vmatprep.subr.mxu0 0.0
        %729 = vmatpush1.msra.mxu0 %v696
        %730 = vmatprep.subr.mxu0 0.0
        %731 = vmatpush1.msra.mxu0 %v695
        %732 = vmatprep.subr.mxu0 0.0
        %733 = vmatpush1.msra.mxu0 %v694
        %734 = vmatprep.subr.mxu0 0.0
        %735 = vmatpush2.msra.mxu0 0.0
        %736 = vmatprep.subr.mxu0 0.0
        %737 = vmatpush2.msra.mxu0 0.0
        %738 = vmatprep.subr.mxu0 0.0
        %739 = vmatpush2.msra.mxu0 0.0
        %740 = vmatprep.subr.mxu0 0.0
        %741 = vmatpush2.msra.mxu0 0.0
        %742 = vmatprep.subr.mxu0 0.0
        %743 = vmatpush2.msra.mxu0 0.0
        %744 = vmatprep.subr.mxu0 0.0
        %745 = vmatpush2.msra.mxu0 0.0
        %746 = vmatprep.subr.mxu0 0.0
        %747 = vmatpush2.msra.mxu0 0.0
        %748 = vmatprep.subr.mxu0 0.0
        %749 = vmatpush2.msra.mxu0 0.0
        %750 = vmatprep.subr.mxu0 0.0
        %751 = vmatpush2.msra.mxu0 0.0
        %752 = vmatprep.subr.mxu0 0.0
        %753 = vmatpush2.msra.mxu0 0.0
        %754 = vmatprep.subr.mxu0 0.0
        %755 = vmatpush2.msra.mxu0 0.0
        %756 = vmatprep.subr.mxu0 0.0
        %757 = vmatpush2.msra.mxu0 0.0
        %758 = vmatprep.subr.mxu0 0.0
        %759 = vmatpush2.msra.mxu0 0.0
        %760 = vmatprep.subr.mxu0 0.0
        %761 = vmatpush2.msra.mxu0 0.0
        %762 = vmatprep.subr.mxu0 0.0
        %763 = vmatpush2.msra.mxu0 0.0
        %764 = vmatprep.subr.mxu0 0.0
        %765 = vmatpush2.msra.mxu0 0.0
        %766 = vmatprep.mubr.f32.mxu0 0.0
        %767 = vmatmul.mubr.f32.gmra.mxu0 %v700
        %v768 = vpop.f32.mrf.mxu0
        %v769 = vadd.f32 0.0, %v768
        %v770 = vpop.f32.mrf.mxu0
        %771 = vdwg.mxu0
        %v772 = vld [vmem:[%s313] sm:$0xff]
        %v773 = vld [vmem:[%s4] sm:$0x1]
        %v774 = vlaneseq
        %v775 = vshrl.u32 %v774, 7
        %v776 = vsub.s32 0, %v775
        %v777 = vrot.slane %v773, %v776
        %v778 = vld [vmem:[%s4 + $0x1] sm:$0x1]
        %vm779 = vcmp.eq.s32.totalorder %v772, 1
        %v780 = vsel %vm779, 1, 0
        %781 = vset.pattern.permute.xlu0 0
        %782 = vperm.xlu0 %781, %v780
        %v783 = vpop.permute.xlu0 %782
        %vm784 = vcmp.eq.s32.totalorder %v783, 1
        %v785 = vlaneseq
        %v786 = vshrl.u32 %v785, 7
        %v787 = vsub.s32 0, %v786
        %v788 = vrot.slane %v778, %v787
        %v789 = vsel %vm784, %v788, %v777
        %s790 = smul.u32 %s320, 8
        %s791 = scalar_lea.vmem [#allocation2], %s790
        %v792 = vld [vmem:[%s791] sm:$0xff]
        %v793 = vadd.f32 %v792, %v769
        %v794 = vadd.f32 %v793, %v789
        %795 = vadd.xlane.f32.xlu0 %v794
        %v796 = vpop.xlane.xlu0 %795
        %v797 = vrcp.pop 128.0
        %v798 = vmul.f32 %v796, %v797
        %v799 = vsub.f32 %v794, %v798
        %v800 = vmul.f32 %v799, %v799
        %801 = vadd.xlane.f32.xlu0 %v800
        %v802 = vpop.xlane.xlu0 %801
        %v803 = vmul.f32 %v802, %v797
        %v804 = vadd.f32 %v803, 1e-12
        %v805 = vrsqrt.pop %v804
        %v806 = vmul.f32 %v799, %v805
        %v807 = vld [vmem:[%s5] sm:$0x1]
        %v809 = vlaneseq
        %v810 = vshrl.u32 %v809, 7
        %v811 = vsub.s32 0, %v810
        %v812 = vrot.slane %v807, %v811
        %v814 = vmul.f32 %v812, %v806
        %v815 = vld [vmem:[%s6] sm:$0x1]
        %v817 = vlaneseq
        %v818 = vshrl.u32 %v817, 7
        %v819 = vsub.s32 0, %v818
        %v820 = vrot.slane %v815, %v819
        %v822 = vadd.f32 %v814, %v820
        %823 = vst [vmem:[%s299] sm:$0xff] %v822
        %s824 = sand.u32 %s196, 1
        %s825 = scalar_lea.sflag [#allocation7], %s824
        %s826 = sand.u32 %s196, 1
        %s827 = smul.addr %s826, 8
        %s828 = scalar_lea.vmem [#allocation6], %s827
        // Predicated region
        $region117: #{tpu_custom_call.1} parent=43 // pred_check
          %p829 = pneg %p206
        $region118: #{tpu_custom_call.1} parent=43 // pred_check_branch
          %831 = sbr.rel (%p829) target = $region120
        $region119: #{tpu_custom_call.1} parent=43 // pred_region
          %s832 = smul.u32 %s32, 2
          %s833 = sadd.s32 %s832, %s33
          %s835 = ssub.s32 128, 128
          %836 = vsyncadd %s825, %s835
          %s837 = smul.addr %s833, 128
          %s838 = scalar_lea.hbm %s8, %s837
          %s840 = sshll.u32 %s828, 4
          %s841 = int_to_ptr.vmem [resolvable:$true] %s840
          %843 = dma.vmem_to_hbm [thread:$0]  %s841, 128, %s838, %s825
        $region120: #{tpu_custom_call.1} parent=43 // pred_fallthru
          _
      $region44: #{tpu_custom_call.1} parent=5 // pred_fallthru
        _
      %p844 = scmp.le.s32.totalorder 2, %s23
      // Predicated region
      $region121: #{tpu_custom_call.1} parent=5 // pred_check
        %p845 = pneg %p844
      $region122: #{tpu_custom_call.1} parent=5 // pred_check_branch
        %847 = sbr.rel (%p845) target = $region124
      $region123: #{tpu_custom_call.1} parent=5 // pred_region
        %s848 = ssub.s32 %s23, 2
        // Predicated region
        $region125: #{tpu_custom_call.1} parent=123 // pred_check
          %p849 = pneg %p212
        $region126: #{tpu_custom_call.1} parent=123 // pred_check_branch
          %851 = sbr.rel (%p849) target = $region128
        $region127: #{tpu_custom_call.1} parent=123 // pred_region
          %s852 = sand.u32 %s197, 1
          %s853 = scalar_lea.sflag [#allocation7], %s852
          %s854 = sand.u32 %s197, 1
          %s855 = smul.addr %s854, 8
          %s856 = scalar_lea.vmem [#allocation6], %s855
          %857 = dma.done %s853, 128
        $region128: #{tpu_custom_call.1} parent=123 // pred_fallthru
          _
      $region124: #{tpu_custom_call.1} parent=5 // pred_fallthru
        _
    $region6: #{tpu_custom_call.1} parent=1 // loop_footer
      %s27 = sadd.s32 1, %s23
    $region7: #{tpu_custom_call.1} parent=1 // loop_footer_branch
      %22 = sbr.rel target = $region3
    $region8: #{tpu_custom_call.1} parent=1 // loop_exit
      _
    %858 = vsyncpa [#allocation7], 1
    %s859 = scalar_lea.sflag [#allocation7], 1
    %860 = vsyncpa %s859, 1
  %861 = vsyncmov [#allocation3]
  %s862 = vpop.sfrf %861
  %p863 = scmp.eq.s32.totalorder %s862, 0
  %p864 = pneg %p863
  %866 = shalt.err (%p864)
  %s867 = scalar_lea.sflag [#allocation3], 1
  %868 = vsyncmov %s867
  %s869 = vpop.sfrf %868
  %p870 = scmp.eq.s32.totalorder %s869, 0
  %p871 = pneg %p870
  %873 = shalt.err (%p871)
  %s874 = scalar_lea.sflag [#allocation3], 2
  %875 = vsyncmov %s874
  %s876 = vpop.sfrf %875
  %p877 = scmp.eq.s32.totalorder %s876, 0
  %p878 = pneg %p877
  %880 = shalt.err (%p878)
  %s881 = scalar_lea.sflag [#allocation3], 3
  %882 = vsyncmov %s881
  %s883 = vpop.sfrf %882
  %p884 = scmp.eq.s32.totalorder %s883, 0
  %p885 = pneg %p884
  %887 = shalt.err (%p885)
  %s888 = scalar_lea.sflag [#allocation3], 4
  %889 = vsyncmov %s888
  %s890 = vpop.sfrf %889
  %p891 = scmp.eq.s32.totalorder %s890, 0
  %p892 = pneg %p891
  %894 = shalt.err (%p892)
  %s895 = scalar_lea.sflag [#allocation3], 5
  %896 = vsyncmov %s895
  %s897 = vpop.sfrf %896
  %p898 = scmp.eq.s32.totalorder %s897, 0
  %p899 = pneg %p898
  %901 = shalt.err (%p899)
  %s902 = scalar_lea.sflag [#allocation3], 6
  %903 = vsyncmov %s902
  %s904 = vpop.sfrf %903
  %p905 = scmp.eq.s32.totalorder %s904, 0
  %p906 = pneg %p905
  %908 = shalt.err (%p906)
  %s909 = scalar_lea.sflag [#allocation3], 7
  %910 = vsyncmov %s909
  %s911 = vpop.sfrf %910
  %p912 = scmp.eq.s32.totalorder %s911, 0
  %p913 = pneg %p912
  %915 = shalt.err (%p913)
  %s916 = scalar_lea.sflag [#allocation3], 8
  %917 = vsyncmov %s916
  %s918 = vpop.sfrf %917
  %p919 = scmp.eq.s32.totalorder %s918, 0
  %p920 = pneg %p919
  %922 = shalt.err (%p920)
  %s923 = scalar_lea.sflag [#allocation3], 9
  %924 = vsyncmov %s923
  %s925 = vpop.sfrf %924
  %p926 = scmp.eq.s32.totalorder %s925, 0
  %p927 = pneg %p926
  %929 = shalt.err (%p927)
  %s930 = scalar_lea.sflag [#allocation3], 10
  %931 = vsyncmov %s930
  %s932 = vpop.sfrf %931
  %p933 = scmp.eq.s32.totalorder %s932, 0
  %p934 = pneg %p933
  %936 = shalt.err (%p934)
  %s937 = scalar_lea.sflag [#allocation3], 11
  %938 = vsyncmov %s937
  %s939 = vpop.sfrf %938
  %p940 = scmp.eq.s32.totalorder %s939, 0
  %p941 = pneg %p940
  %943 = shalt.err (%p941)
  %s944 = scalar_lea.sflag [#allocation3], 12
  %945 = vsyncmov %s944
  %s946 = vpop.sfrf %945
  %p947 = scmp.eq.s32.totalorder %s946, 0
  %p948 = pneg %p947
  %950 = shalt.err (%p948)
  %s951 = scalar_lea.sflag [#allocation3], 13
  %952 = vsyncmov %s951
  %s953 = vpop.sfrf %952
  %p954 = scmp.eq.s32.totalorder %s953, 0
  %p955 = pneg %p954
  %957 = shalt.err (%p955)
  %s958 = scalar_lea.sflag [#allocation3], 14
  %959 = vsyncmov %s958
  %s960 = vpop.sfrf %959
  %p961 = scmp.eq.s32.totalorder %s960, 0
  %p962 = pneg %p961
  %964 = shalt.err (%p962)
  %s965 = scalar_lea.sflag [#allocation3], 15
  %966 = vsyncmov %s965
  %s967 = vpop.sfrf %966
  %p968 = scmp.eq.s32.totalorder %s967, 0
  %p969 = pneg %p968
  %971 = shalt.err (%p969)
  %s972 = scalar_lea.sflag [#allocation3], 16
  %973 = vsyncmov %s972
  %s974 = vpop.sfrf %973
  %p975 = scmp.eq.s32.totalorder %s974, 0
  %p976 = pneg %p975
  %978 = shalt.err (%p976)
  %s979 = scalar_lea.sflag [#allocation3], 17
  %980 = vsyncmov %s979
  %s981 = vpop.sfrf %980
  %p982 = scmp.eq.s32.totalorder %s981, 0
  %p983 = pneg %p982
  %985 = shalt.err (%p983)
  %s986 = scalar_lea.sflag [#allocation3], 18
  %987 = vsyncmov %s986
  %s988 = vpop.sfrf %987
  %p989 = scmp.eq.s32.totalorder %s988, 0
  %p990 = pneg %p989
  %992 = shalt.err (%p990)
  %s993 = scalar_lea.sflag [#allocation3], 19
  %994 = vsyncmov %s993
  %s995 = vpop.sfrf %994
  %p996 = scmp.eq.s32.totalorder %s995, 0
  %p997 = pneg %p996
  %999 = shalt.err (%p997)
  %s1000 = scalar_lea.sflag [#allocation3], 20
  %1001 = vsyncmov %s1000
  %s1002 = vpop.sfrf %1001
  %p1003 = scmp.eq.s32.totalorder %s1002, 0
  %p1004 = pneg %p1003
  %1006 = shalt.err (%p1004)
  %s1007 = scalar_lea.sflag [#allocation3], 21
  %1008 = vsyncmov %s1007
  %s1009 = vpop.sfrf %1008
  %p1010 = scmp.eq.s32.totalorder %s1009, 0
  %p1011 = pneg %p1010
  %1013 = shalt.err (%p1011)
  %s1014 = scalar_lea.sflag [#allocation3], 22
  %1015 = vsyncmov %s1014
  %s1016 = vpop.sfrf %1015
  %p1017 = scmp.eq.s32.totalorder %s1016, 0
  %p1018 = pneg %p1017
  %1020 = shalt.err (%p1018)
  %s1021 = scalar_lea.sflag [#allocation3], 23
  %1022 = vsyncmov %s1021
  %s1023 = vpop.sfrf %1022
  %p1024 = scmp.eq.s32.totalorder %s1023, 0
  %p1025 = pneg %p1024
  %1027 = shalt.err (%p1025)
  %s1028 = scalar_lea.sflag [#allocation3], 24
  %1029 = vsyncmov %s1028
  %s1030 = vpop.sfrf %1029
  %p1031 = scmp.eq.s32.totalorder %s1030, 0
  %p1032 = pneg %p1031
  %1034 = shalt.err (%p1032)
  %s1035 = scalar_lea.sflag [#allocation3], 25
  %1036 = vsyncmov %s1035
  %s1037 = vpop.sfrf %1036
  %p1038 = scmp.eq.s32.totalorder %s1037, 0
  %p1039 = pneg %p1038
  %1041 = shalt.err (%p1039)
  %s1042 = scalar_lea.sflag [#allocation3], 26
  %1043 = vsyncmov %s1042
  %s1044 = vpop.sfrf %1043
  %p1045 = scmp.eq.s32.totalorder %s1044, 0
  %p1046 = pneg %p1045
  %1048 = shalt.err (%p1046)
  %s1049 = scalar_lea.sflag [#allocation3], 27
  %1050 = vsyncmov %s1049
  %s1051 = vpop.sfrf %1050
  %p1052 = scmp.eq.s32.totalorder %s1051, 0
  %p1053 = pneg %p1052
  %1055 = shalt.err (%p1053)
  %s1056 = scalar_lea.sflag [#allocation3], 28
  %1057 = vsyncmov %s1056
  %s1058 = vpop.sfrf %1057
  %p1059 = scmp.eq.s32.totalorder %s1058, 0
  %p1060 = pneg %p1059
  %1062 = shalt.err (%p1060)
  %s1063 = scalar_lea.sflag [#allocation3], 29
  %1064 = vsyncmov %s1063
  %s1065 = vpop.sfrf %1064
  %p1066 = scmp.eq.s32.totalorder %s1065, 0
  %p1067 = pneg %p1066
  %1069 = shalt.err (%p1067)
  %s1070 = scalar_lea.sflag [#allocation3], 30
  %1071 = vsyncmov %s1070
  %s1072 = vpop.sfrf %1071
  %p1073 = scmp.eq.s32.totalorder %s1072, 0
  %p1074 = pneg %p1073
  %1076 = shalt.err (%p1074)
  %s1077 = scalar_lea.sflag [#allocation3], 31
  %1078 = vsyncmov %s1077
  %s1079 = vpop.sfrf %1078
  %p1080 = scmp.eq.s32.totalorder %s1079, 0
  %p1081 = pneg %p1080
  %1083 = shalt.err (%p1081)

</llo_original>
